<compile_context>
chip_gen: v6e
topology: v6e:2x2x1
jax: 0.10.0
libtpu: 0.0.40
codegen_flags: <defaults>
</compile_context>

<pallas_src>
import functools

import jax
import jax.numpy as jnp
import numpy as np
from jax import lax
from jax.experimental import pallas as pl
from jax.experimental.pallas import tpu as pltpu

# Module instance being reproduced:
#   ReLUConvBN(C_in=4, C_out=8, kernel_size=3, stride=1, padding=1,
#              dilation=1, affine=True, track_running_stats=True)
# Training-mode BatchNorm2d (batch statistics, biased variance); Conv2d has
# no bias (bias = not affine = False).
C_IN, C_OUT = 4, 8
KH = KW = 3
STRIDE = 1
PADDING = 1
DILATION = 1
BN_EPS = 1e-5  # PyTorch BatchNorm2d default


def _relu_conv_bn_kernel(x_ref, w_gb_ref, mask_ref, o_ref, xr_ref, *, wp, n_valid):
    # x_ref:    (C_in, XFW)        zero-padded input, channel-major, per-image
    #                              spatial dims flattened to Hp*Wp, images
    #                              concatenated along lanes (+ lane padding).
    # w_gb_ref: (KH*KW+1, C_out, C_in)  rows 0..KH*KW-1: per-tap conv weights
    #                              w[:, :, kh, kw]; last row packs gamma
    #                              (col 0) and beta (col 1) to save a DMA.
    # mask_ref: (1, M)             1.0 on real (n, ho, wo) output columns,
    #                              0.0 on flattened-padding/alignment columns.
    # o_ref:    (C_out, M)         lane-dense output, M a multiple of 128.
    # xr_ref:   (C_in, XFW)        VMEM scratch holding ReLU(x).
    m = o_ref.shape[1]
    n_taps = KH * KW

    # ReLU exactly once, on the C_in-wide operand (ReLU(0) == 0, so it
    # commutes with the zero padding and the shifted tap reads below).
    xr_ref[...] = jnp.maximum(x_ref[...], 0.0)

    # Stride-1 convolution over the flattened padded image: tap (kh, kw) of
    # output column q is input column q + (kh*Wp + kw)*dilation.  Nine small
    # MXU matmuls with f32 accumulation; at most ~6 vregs live at any time.
    acc = jnp.zeros((o_ref.shape[0], m), jnp.float32)
    for kh in range(KH):
        for kw in range(KW):
            off = (kh * wp + kw) * DILATION
            tap = xr_ref[:, off:off + m]                         # (C_in, M)
            wt = w_gb_ref[kh * KW + kw]                          # (C_out, C_in)
            acc = acc + jnp.dot(wt, tap, preferred_element_type=jnp.float32)

    # Training-mode BatchNorm2d: per-channel mean / biased variance over the
    # N*Ho*Wo real output positions.  The mask zeroes the garbage columns that
    # exist only because of the flattened-padding layout.  Two-pass mean/var
    # (cheap -- acc is ~5 vregs) avoids E[x^2] - mean^2 cancellation.
    mask = mask_ref[...]                                          # (1, M)
    inv_n = 1.0 / float(n_valid)
    mean = jnp.sum(acc * mask, axis=1, keepdims=True) * inv_n     # (C_out, 1)
    diff = (acc - mean) * mask
    var = jnp.sum(diff * diff, axis=1, keepdims=True) * inv_n     # biased var

    gb = w_gb_ref[n_taps]                                         # (C_out, C_in)
    gamma = gb[:, 0:1]
    beta = gb[:, 1:2]
    scale = gamma * lax.rsqrt(var + BN_EPS)    # fold gamma -> 1 FMA / element
    shift = beta - mean * scale
    o_ref[...] = (acc * scale + shift).astype(o_ref.dtype)
    # TODO(synk): PyTorch's track_running_stats=True also updates
    # running_mean/running_var in-place during training; that stateful side
    # effect is not emitted here (forward output does not depend on it).


def relu_conv_bn(x_nchw, w_oihw, gamma, beta):
    """x_nchw: (N, C_in, H, W); w_oihw: (C_out, C_in, KH, KW) (PyTorch layouts)."""
    n, c_in, h, w = x_nchw.shape
    c_out = w_oihw.shape[0]
    assert STRIDE == 1, "flattened-shift conv layout assumes stride 1"
    assert c_in >= 2, "gamma/beta packing into the weight slab needs C_in >= 2"

    hp, wp = h + 2 * PADDING, w + 2 * PADDING
    ho = (h + 2 * PADDING - DILATION * (KH - 1) - 1) // STRIDE + 1
    wo = (w + 2 * PADDING - DILATION * (KW - 1) - 1) // STRIDE + 1
    l_img = hp * wp                                   # flattened padded image
    max_off = DILATION * ((KH - 1) * wp + (KW - 1))   # largest tap shift
    m_raw = (n - 1) * l_img + (ho - 1) * wp + wo      # last real column + 1
    m_total = pl.cdiv(m_raw, 128) * 128               # lane-dense output width
    xf_w = pl.cdiv(m_total + max_off, 128) * 128      # input width (reads fit)
    n_valid = n * ho * wo

    # ---- layout glue (plain JAX, input-sized only): pad + channel-major flatten
    xp = jnp.pad(x_nchw, ((0, 0), (0, 0), (PADDING, PADDING), (PADDING, PADDING)))
    xflat = jnp.transpose(xp, (1, 0, 2, 3)).reshape(c_in, n * l_img)
    xflat = jnp.pad(xflat, ((0, 0), (0, xf_w - n * l_img)))       # lane padding

    # Per-tap weights (KH*KW, C_out, C_in); gamma/beta appended as one extra
    # row so the kernel gets a single parameter operand (fewer tiny DMAs).
    w_taps = jnp.transpose(w_oihw, (2, 3, 0, 1)).reshape(KH * KW, c_out, c_in)
    gb_row = jnp.zeros((1, c_out, c_in), w_taps.dtype)
    gb_row = gb_row.at[0, :, 0].set(gamma).at[0, :, 1].set(beta)
    w_gb = jnp.concatenate([w_taps, gb_row], axis=0)

    # Static 0/1 mask of columns that are real (n, ho, wo) output positions
    # (compile-time constant, built with numpy).
    m_idx = np.arange(m_total)
    p = m_idx % l_img
    valid = (m_idx < m_raw) & (p % wp < wo) & (p // wp < ho)
    mask = jnp.asarray(valid.astype(np.float32)).reshape(1, m_total)

    kernel = functools.partial(_relu_conv_bn_kernel, wp=wp, n_valid=n_valid)
    # Single-tile kernel: every operand here is a few KiB, so a grid over M
    # would only add per-step overhead.
    # TODO(synk): for large N*H*W, add an M-grid (TILE_M multiple of 128,
    # marked "parallel" so v7x's two TensorCores split it) with a two-phase
    # BN (accumulate per-channel sum/sum-sq across tiles, normalize in a
    # second pass) and size TILE_M for v7x's 64 MiB VMEM.
    out_cm = pl.pallas_call(
        kernel,
        out_shape=jax.ShapeDtypeStruct((c_out, m_total), jnp.float32),
        in_specs=[
            pl.BlockSpec(memory_space=pltpu.MemorySpace.VMEM),
            pl.BlockSpec(memory_space=pltpu.MemorySpace.VMEM),
            pl.BlockSpec(memory_space=pltpu.MemorySpace.VMEM),
        ],
        out_specs=pl.BlockSpec(memory_space=pltpu.MemorySpace.VMEM),
        scratch_shapes=[pltpu.VMEM((c_in, xf_w), jnp.float32)],
    )(xflat, w_gb, mask)

    # Un-flatten: (C_out, M) -> (C_out, N, Hp, Wp) -> crop valid window -> NCHW.
    # TODO(synk): skip this transpose and return channel-major (C_out,N,Ho,Wo)
    # if the downstream consumer accepts it; kept for exact module parity.
    if m_total < n * l_img:
        out_full = jnp.pad(out_cm, ((0, 0), (0, n * l_img - m_total)))
    else:
        out_full = out_cm[:, :n * l_img]
    out = out_full.reshape(c_out, n, hp, wp)[:, :, :ho, :wo]
    return jnp.transpose(out, (1, 0, 2, 3))


def _reference(x_nchw, w_oihw, gamma, beta):
    """Pure-JAX reference: ReLU -> conv2d -> training-mode BatchNorm2d."""
    xr = jnp.maximum(x_nchw, 0.0)
    conv = lax.conv_general_dilated(
        xr, w_oihw, window_strides=(STRIDE, STRIDE),
        padding=[(PADDING, PADDING), (PADDING, PADDING)],
        rhs_dilation=(DILATION, DILATION),
        dimension_numbers=("NCHW", "OIHW", "NCHW"))
    mean = jnp.mean(conv, axis=(0, 2, 3), keepdims=True)
    var = jnp.mean((conv - mean) ** 2, axis=(0, 2, 3), keepdims=True)
    y = (conv - mean) * lax.rsqrt(var + BN_EPS)
    return y * gamma.reshape(1, -1, 1, 1) + beta.reshape(1, -1, 1, 1)


if __name__ == "__main__":
    key = jax.random.PRNGKey(0)
    k1, k2, k3, k4 = jax.random.split(key, 4)

    # PyTorch-convention input: NCHW
    x = jax.random.normal(k1, (2, C_IN, 16, 16), dtype=jnp.float32)
    # Conv2d weight (C_out, C_in, KH, KW); no bias since affine=True.
    w = 0.1 * jax.random.normal(k2, (C_OUT, C_IN, KH, KW), dtype=jnp.float32)
    # BatchNorm affine params (non-trivial values to exercise the path).
    gamma = 1.0 + 0.1 * jax.random.normal(k3, (C_OUT,), dtype=jnp.float32)
    beta = 0.1 * jax.random.normal(k4, (C_OUT,), dtype=jnp.float32)

    out = jax.jit(relu_conv_bn)(x, w, gamma, beta)
    jax.block_until_ready(out)

    ref = _reference(x, w, gamma, beta)
    assert out.shape == (2, C_OUT, 16, 16)
    assert jnp.allclose(out, ref, atol=1e-4, rtol=1e-4)

    print("KERNEL_OK")
</pallas_src>

<mosaic_0001>
module attributes {stable_mosaic.version = 11 : i64} {
  func.func @_relu_conv_bn_kernel(%arg0: memref<4x768xf32, #tpu.memory_space<vmem>>, %arg1: memref<10x8x4xf32, #tpu.memory_space<vmem>>, %arg2: memref<1x640xf32, #tpu.memory_space<vmem>>, %arg3: memref<8x640xf32, #tpu.memory_space<vmem>>, %arg4: memref<4x768xf32, #tpu.memory_space<vmem>>) attributes {dimension_semantics = [], scalar_prefetch = 0 : i64, scratch_operands = 1 : i64, tpu.core_type = #tpu.core_type<tc>} {
    %c0 = arith.constant 0 : index
    %c0_0 = arith.constant 0 : index
    %0 = vector.load %arg0[%c0, %c0_0] : memref<4x768xf32, #tpu.memory_space<vmem>>, vector<4x768xf32>
    %cst = arith.constant 0.000000e+00 : f32
    %1 = vector.broadcast %cst : f32 to vector<4x768xf32>
    %2 = arith.maximumf %0, %1 : vector<4x768xf32>
    %c0_1 = arith.constant 0 : index
    %c0_2 = arith.constant 0 : index
    %3 = vector.load %arg4[%c0_1, %c0_2] : memref<4x768xf32, #tpu.memory_space<vmem>>, vector<4x768xf32>
    tpu.vector_store %arg4[%c0_1, %c0_2], %2 {strides = array<i32>} : memref<4x768xf32, #tpu.memory_space<vmem>>, vector<4x768xf32>,
    %cst_3 = arith.constant 0.000000e+00 : f32
    %4 = vector.broadcast %cst_3 : f32 to vector<8x640xf32>
    %c0_4 = arith.constant 0 : index
    %c0_5 = arith.constant 0 : index
    %5 = vector.load %arg4[%c0_4, %c0_5] : memref<4x768xf32, #tpu.memory_space<vmem>>, vector<4x640xf32>
    %c0_6 = arith.constant 0 : index
    %c0_7 = arith.constant 0 : index
    %c0_8 = arith.constant 0 : index
    %6 = vector.load %arg1[%c0_6, %c0_7, %c0_8] : memref<10x8x4xf32, #tpu.memory_space<vmem>>, vector<1x8x4xf32>
    %7 = vector.shape_cast %6 : vector<1x8x4xf32> to vector<8x4xf32>
    %cst_9 = arith.constant dense<0.000000e+00> : vector<8x640xf32>
    %8 = tpu.matmul %7, %5, %cst_9 {dimension_numbers = #tpu.dot_dimension_numbers<[1], [0], [0], [1], [0, 0, 1, 1], [], []>} : vector<8x4xf32>, vector<4x640xf32>, vector<8x640xf32> -> vector<8x640xf32>
    %9 = arith.addf %4, %8 : vector<8x640xf32>
    %c0_10 = arith.constant 0 : index
    %c1 = arith.constant 1 : index
    %10 = vector.load %arg4[%c0_10, %c1] : memref<4x768xf32, #tpu.memory_space<vmem>>, vector<4x640xf32>
    %c1_11 = arith.constant 1 : index
    %c0_12 = arith.constant 0 : index
    %c0_13 = arith.constant 0 : index
    %11 = vector.load %arg1[%c1_11, %c0_12, %c0_13] : memref<10x8x4xf32, #tpu.memory_space<vmem>>, vector<1x8x4xf32>
    %12 = vector.shape_cast %11 : vector<1x8x4xf32> to vector<8x4xf32>
    %cst_14 = arith.constant dense<0.000000e+00> : vector<8x640xf32>
    %13 = tpu.matmul %12, %10, %cst_14 {dimension_numbers = #tpu.dot_dimension_numbers<[1], [0], [0], [1], [0, 0, 1, 1], [], []>} : vector<8x4xf32>, vector<4x640xf32>, vector<8x640xf32> -> vector<8x640xf32>
    %14 = arith.addf %9, %13 : vector<8x640xf32>
    %c0_15 = arith.constant 0 : index
    %c2 = arith.constant 2 : index
    %15 = vector.load %arg4[%c0_15, %c2] : memref<4x768xf32, #tpu.memory_space<vmem>>, vector<4x640xf32>
    %c2_16 = arith.constant 2 : index
    %c0_17 = arith.constant 0 : index
    %c0_18 = arith.constant 0 : index
    %16 = vector.load %arg1[%c2_16, %c0_17, %c0_18] : memref<10x8x4xf32, #tpu.memory_space<vmem>>, vector<1x8x4xf32>
    %17 = vector.shape_cast %16 : vector<1x8x4xf32> to vector<8x4xf32>
    %cst_19 = arith.constant dense<0.000000e+00> : vector<8x640xf32>
    %18 = tpu.matmul %17, %15, %cst_19 {dimension_numbers = #tpu.dot_dimension_numbers<[1], [0], [0], [1], [0, 0, 1, 1], [], []>} : vector<8x4xf32>, vector<4x640xf32>, vector<8x640xf32> -> vector<8x640xf32>
    %19 = arith.addf %14, %18 : vector<8x640xf32>
    %c0_20 = arith.constant 0 : index
    %c18 = arith.constant 18 : index
    %20 = vector.load %arg4[%c0_20, %c18] : memref<4x768xf32, #tpu.memory_space<vmem>>, vector<4x640xf32>
    %c3 = arith.constant 3 : index
    %c0_21 = arith.constant 0 : index
    %c0_22 = arith.constant 0 : index
    %21 = vector.load %arg1[%c3, %c0_21, %c0_22] : memref<10x8x4xf32, #tpu.memory_space<vmem>>, vector<1x8x4xf32>
    %22 = vector.shape_cast %21 : vector<1x8x4xf32> to vector<8x4xf32>
    %cst_23 = arith.constant dense<0.000000e+00> : vector<8x640xf32>
    %23 = tpu.matmul %22, %20, %cst_23 {dimension_numbers = #tpu.dot_dimension_numbers<[1], [0], [0], [1], [0, 0, 1, 1], [], []>} : vector<8x4xf32>, vector<4x640xf32>, vector<8x640xf32> -> vector<8x640xf32>
    %24 = arith.addf %19, %23 : vector<8x640xf32>
    %c0_24 = arith.constant 0 : index
    %c19 = arith.constant 19 : index
    %25 = vector.load %arg4[%c0_24, %c19] : memref<4x768xf32, #tpu.memory_space<vmem>>, vector<4x640xf32>
    %c4 = arith.constant 4 : index
    %c0_25 = arith.constant 0 : index
    %c0_26 = arith.constant 0 : index
    %26 = vector.load %arg1[%c4, %c0_25, %c0_26] : memref<10x8x4xf32, #tpu.memory_space<vmem>>, vector<1x8x4xf32>
    %27 = vector.shape_cast %26 : vector<1x8x4xf32> to vector<8x4xf32>
    %cst_27 = arith.constant dense<0.000000e+00> : vector<8x640xf32>
    %28 = tpu.matmul %27, %25, %cst_27 {dimension_numbers = #tpu.dot_dimension_numbers<[1], [0], [0], [1], [0, 0, 1, 1], [], []>} : vector<8x4xf32>, vector<4x640xf32>, vector<8x640xf32> -> vector<8x640xf32>
    %29 = arith.addf %24, %28 : vector<8x640xf32>
    %c0_28 = arith.constant 0 : index
    %c20 = arith.constant 20 : index
    %30 = vector.load %arg4[%c0_28, %c20] : memref<4x768xf32, #tpu.memory_space<vmem>>, vector<4x640xf32>
    %c5 = arith.constant 5 : index
    %c0_29 = arith.constant 0 : index
    %c0_30 = arith.constant 0 : index
    %31 = vector.load %arg1[%c5, %c0_29, %c0_30] : memref<10x8x4xf32, #tpu.memory_space<vmem>>, vector<1x8x4xf32>
    %32 = vector.shape_cast %31 : vector<1x8x4xf32> to vector<8x4xf32>
    %cst_31 = arith.constant dense<0.000000e+00> : vector<8x640xf32>
    %33 = tpu.matmul %32, %30, %cst_31 {dimension_numbers = #tpu.dot_dimension_numbers<[1], [0], [0], [1], [0, 0, 1, 1], [], []>} : vector<8x4xf32>, vector<4x640xf32>, vector<8x640xf32> -> vector<8x640xf32>
    %34 = arith.addf %29, %33 : vector<8x640xf32>
    %c0_32 = arith.constant 0 : index
    %c36 = arith.constant 36 : index
    %35 = vector.load %arg4[%c0_32, %c36] : memref<4x768xf32, #tpu.memory_space<vmem>>, vector<4x640xf32>
    %c6 = arith.constant 6 : index
    %c0_33 = arith.constant 0 : index
    %c0_34 = arith.constant 0 : index
    %36 = vector.load %arg1[%c6, %c0_33, %c0_34] : memref<10x8x4xf32, #tpu.memory_space<vmem>>, vector<1x8x4xf32>
    %37 = vector.shape_cast %36 : vector<1x8x4xf32> to vector<8x4xf32>
    %cst_35 = arith.constant dense<0.000000e+00> : vector<8x640xf32>
    %38 = tpu.matmul %37, %35, %cst_35 {dimension_numbers = #tpu.dot_dimension_numbers<[1], [0], [0], [1], [0, 0, 1, 1], [], []>} : vector<8x4xf32>, vector<4x640xf32>, vector<8x640xf32> -> vector<8x640xf32>
    %39 = arith.addf %34, %38 : vector<8x640xf32>
    %c0_36 = arith.constant 0 : index
    %c37 = arith.constant 37 : index
    %40 = vector.load %arg4[%c0_36, %c37] : memref<4x768xf32, #tpu.memory_space<vmem>>, vector<4x640xf32>
    %c7 = arith.constant 7 : index
    %c0_37 = arith.constant 0 : index
    %c0_38 = arith.constant 0 : index
    %41 = vector.load %arg1[%c7, %c0_37, %c0_38] : memref<10x8x4xf32, #tpu.memory_space<vmem>>, vector<1x8x4xf32>
    %42 = vector.shape_cast %41 : vector<1x8x4xf32> to vector<8x4xf32>
    %cst_39 = arith.constant dense<0.000000e+00> : vector<8x640xf32>
    %43 = tpu.matmul %42, %40, %cst_39 {dimension_numbers = #tpu.dot_dimension_numbers<[1], [0], [0], [1], [0, 0, 1, 1], [], []>} : vector<8x4xf32>, vector<4x640xf32>, vector<8x640xf32> -> vector<8x640xf32>
    %44 = arith.addf %39, %43 : vector<8x640xf32>
    %c0_40 = arith.constant 0 : index
    %c38 = arith.constant 38 : index
    %45 = vector.load %arg4[%c0_40, %c38] : memref<4x768xf32, #tpu.memory_space<vmem>>, vector<4x640xf32>
    %c8 = arith.constant 8 : index
    %c0_41 = arith.constant 0 : index
    %c0_42 = arith.constant 0 : index
    %46 = vector.load %arg1[%c8, %c0_41, %c0_42] : memref<10x8x4xf32, #tpu.memory_space<vmem>>, vector<1x8x4xf32>
    %47 = vector.shape_cast %46 : vector<1x8x4xf32> to vector<8x4xf32>
    %cst_43 = arith.constant dense<0.000000e+00> : vector<8x640xf32>
    %48 = tpu.matmul %47, %45, %cst_43 {dimension_numbers = #tpu.dot_dimension_numbers<[1], [0], [0], [1], [0, 0, 1, 1], [], []>} : vector<8x4xf32>, vector<4x640xf32>, vector<8x640xf32> -> vector<8x640xf32>
    %49 = arith.addf %44, %48 : vector<8x640xf32>
    %c0_44 = arith.constant 0 : index
    %c0_45 = arith.constant 0 : index
    %50 = vector.load %arg2[%c0_44, %c0_45] : memref<1x640xf32, #tpu.memory_space<vmem>>, vector<1x640xf32>
    %51 = vector.broadcast %50 : vector<1x640xf32> to vector<8x640xf32>
    %52 = arith.mulf %49, %51 : vector<8x640xf32>
    %cst_46 = arith.constant dense<0.000000e+00> : vector<8xf32>
    %53 = vector.multi_reduction <add>, %52, %cst_46 [1] : vector<8x640xf32> to vector<8xf32>
    %54 = vector.shape_cast %53 : vector<8xf32> to vector<8x1xf32>
    %cst_47 = arith.constant 0.001953125 : f32
    %55 = vector.broadcast %cst_47 : f32 to vector<8x1xf32>
    %56 = arith.mulf %54, %55 : vector<8x1xf32>
    %57 = vector.broadcast %56 : vector<8x1xf32> to vector<8x640xf32>
    %58 = arith.subf %49, %57 : vector<8x640xf32>
    %59 = vector.broadcast %50 : vector<1x640xf32> to vector<8x640xf32>
    %60 = arith.mulf %58, %59 : vector<8x640xf32>
    %61 = arith.mulf %60, %60 : vector<8x640xf32>
    %cst_48 = arith.constant dense<0.000000e+00> : vector<8xf32>
    %62 = vector.multi_reduction <add>, %61, %cst_48 [1] : vector<8x640xf32> to vector<8xf32>
    %63 = vector.shape_cast %62 : vector<8xf32> to vector<8x1xf32>
    %cst_49 = arith.constant 0.001953125 : f32
    %64 = vector.broadcast %cst_49 : f32 to vector<8x1xf32>
    %65 = arith.mulf %63, %64 : vector<8x1xf32>
    %c9 = arith.constant 9 : index
    %c0_50 = arith.constant 0 : index
    %c0_51 = arith.constant 0 : index
    %66 = vector.load %arg1[%c9, %c0_50, %c0_51] : memref<10x8x4xf32, #tpu.memory_space<vmem>>, vector<1x8x4xf32>
    %67 = vector.shape_cast %66 : vector<1x8x4xf32> to vector<8x4xf32>
    %68 = vector.extract_strided_slice %67 {offsets = [0, 0], sizes = [8, 1], strides = [1, 1]} : vector<8x4xf32> to vector<8x1xf32>
    %69 = vector.extract_strided_slice %67 {offsets = [0, 1], sizes = [8, 1], strides = [1, 1]} : vector<8x4xf32> to vector<8x1xf32>
    %cst_52 = arith.constant 9.99999974E-6 : f32
    %70 = vector.broadcast %cst_52 : f32 to vector<8x1xf32>
    %71 = arith.addf %65, %70 : vector<8x1xf32>
    %72 = math.rsqrt %71 : vector<8x1xf32>
    %73 = arith.mulf %68, %72 : vector<8x1xf32>
    %74 = arith.mulf %56, %73 : vector<8x1xf32>
    %75 = arith.subf %69, %74 : vector<8x1xf32>
    %76 = vector.broadcast %73 : vector<8x1xf32> to vector<8x640xf32>
    %77 = arith.mulf %49, %76 : vector<8x640xf32>
    %78 = vector.broadcast %75 : vector<8x1xf32> to vector<8x640xf32>
    %79 = arith.addf %77, %78 : vector<8x640xf32>
    %c0_53 = arith.constant 0 : index
    %c0_54 = arith.constant 0 : index
    %80 = vector.load %arg3[%c0_53, %c0_54] : memref<8x640xf32, #tpu.memory_space<vmem>>, vector<8x640xf32>
    tpu.vector_store %arg3[%c0_53, %c0_54], %79 {strides = array<i32>} : memref<8x640xf32, #tpu.memory_space<vmem>>, vector<8x640xf32>,
    return
  }
}

</mosaic_0001>

<llo_original>
// kernel: relu_conv_bn.1
$region0: #{relu_conv_bn.1}
  #allocation0 [shape = 'u32[]', space=smem, size = 0x4, offset = 0x4, fixed_abs, tag = 'smem constant byte address 0x4 - core index']
  #allocation1 [shape = 'u32[144,128]{1,0:T(1,128)}', space=vmem, size = 0x12000, scoped, tag = 'internal scratch']
  #allocation2 [shape = 'f32[4,768]{1,0:T(4,128)}', space=vmem, size = 0x3000, scoped, tag = 'scratch operand']
  %s0 = inlined_call_operand.vmem [shape: f32[4,768], index: 0, kind: input, shape index: {}]
  %s1 = inlined_call_operand.vmem [shape: f32[10,8,4], index: 1, kind: input, shape index: {}]
  %s2 = inlined_call_operand.vmem [shape: f32[1,640], index: 2, kind: input, shape index: {}]
  %s3 = inlined_call_operand.vmem [shape: f32[8,640], index: 3, kind: output, shape index: {}]
  %s4 = sld [smem:[#allocation0]]
  $region22: #{relu_conv_bn.1} parent=0
    _
  %s6 = ssub.s32 1, %s4
  %s7 = scalar_select 0, %s6, %s4
  // Predicated region
  $region2: #{relu_conv_bn.1} parent=0 // pred_check
    _
  $region3: #{relu_conv_bn.1} parent=0 // pred_check_branch
    %9 = sbr.rel (0) target = $region5
  $region4: #{relu_conv_bn.1} parent=0 // pred_region
    _
  $region5: #{relu_conv_bn.1} parent=0 // pred_fallthru
    _
  // Predicated region
  $region6: #{relu_conv_bn.1} parent=0 // pred_check
    _
  $region7: #{relu_conv_bn.1} parent=0 // pred_check_branch
    %11 = sbr.rel (0) target = $region9
  $region8: #{relu_conv_bn.1} parent=0 // pred_region
    _
  $region9: #{relu_conv_bn.1} parent=0 // pred_fallthru
    _
  // Predicated region
  $region10: #{relu_conv_bn.1} parent=0 // pred_check
    _
  $region11: #{relu_conv_bn.1} parent=0 // pred_check_branch
    %13 = sbr.rel (0) target = $region13
  $region12: #{relu_conv_bn.1} parent=0 // pred_region
    _
  $region13: #{relu_conv_bn.1} parent=0 // pred_fallthru
    _
  %v14 = vld [vmem:[%s0] sm:$0xff]
  %v15 = vld [vmem:[%s0 + $0x8] sm:$0xff]
  %v16 = vld [vmem:[%s0 + $0x10] sm:$0xff]
  %v17 = vmax.f32 %v14, 0.0
  %v18 = vmax.f32 %v15, 0.0
  %v19 = vmax.f32 %v16, 0.0
  %20 = vst [vmem:[#allocation2] sm:$0xff] %v17
  %21 = vst [vmem:[#allocation2 + $0x8] sm:$0xff] %v18
  %22 = vst [vmem:[#allocation2 + $0x10] sm:$0xff] %v19
  %v23 = vld [vmem:[#allocation2] sm:$0xff]
  %v24 = vld [vmem:[#allocation2 + $0x8] sm:$0xff]
  %v25 = vld [vmem:[#allocation2 + $0x10] sm:$0xf]
  %v26 = vld [vmem:[%s1] sm:$0xff]
  %v27 = vld [vmem:[#allocation2] sm:$0xff]
  %v28 = vld [vmem:[#allocation2 + $0x8] sm:$0xff]
  %v29 = vld [vmem:[#allocation2 + $0x10] sm:$0xff]
  %s30 = scalar_lea.vmem %s1, 8
  %v31 = vld [vmem:[%s30] sm:$0xff]
  %v35 = vcombine.high %v27, %v27
  %v36 = vcombine.high %v28, %v28
  %v37 = vcombine.high %v29, %v29
  %38 = vrot.lane.b32.xlu0 %v27, 127
  %v39 = vpop.permute.xlu0 %38
  %40 = vrot.lane.b32.xlu0 %v35, 127
  %v41 = vpop.permute.xlu0 %40
  %42 = vrot.lane.b32.xlu0 %v28, 127
  %v43 = vpop.permute.xlu0 %42
  %44 = vrot.lane.b32.xlu0 %v36, 127
  %v45 = vpop.permute.xlu0 %44
  %46 = vrot.lane.b32.xlu0 %v29, 127
  %v47 = vpop.permute.xlu0 %46
  %48 = vrot.lane.b32.xlu0 %v37, 127
  %v49 = vpop.permute.xlu0 %48
  %vm50 = vcmask 1039360
  %v51 = vsel %vm50, %v39, %v41
  %v52 = vsel %vm50, %v41, %v43
  %v53 = vsel %vm50, %v43, %v45
  %v54 = vsel %vm50, %v45, %v47
  %v55 = vsel %vm50, %v47, %v49
  %vm56 = vcmask 31744
  %v58 = vsel %vm56, %v31, 0
  %vm60 = vcmask 1043456
  %v61 = vsel %vm60, %v51, 0
  %v63 = vsel %vm60, %v52, 0
  %v65 = vsel %vm60, %v53, 0
  %v67 = vsel %vm60, %v54, 0
  %v69 = vsel %vm60, %v55, 0
  %71 = vmatprep.subr.mxu0 0.0
  %72 = vmatpush1.msra.mxu0 0.0
  %73 = vmatprep.subr.mxu0 0.0
  %74 = vmatpush1.msra.mxu0 0.0
  %75 = vmatprep.subr.mxu0 0.0
  %76 = vmatpush1.msra.mxu0 0.0
  %77 = vmatprep.subr.mxu0 0.0
  %78 = vmatpush1.msra.mxu0 0.0
  %79 = vmatprep.subr.mxu0 0.0
  %80 = vmatpush1.msra.mxu0 0.0
  %81 = vmatprep.subr.mxu0 0.0
  %82 = vmatpush1.msra.mxu0 0.0
  %83 = vmatprep.subr.mxu0 0.0
  %84 = vmatpush1.msra.mxu0 0.0
  %85 = vmatprep.subr.mxu0 0.0
  %86 = vmatpush1.msra.mxu0 0.0
  %87 = vmatprep.subr.mxu0 0.0
  %88 = vmatpush1.msra.mxu0 0.0
  %89 = vmatprep.subr.mxu0 0.0
  %90 = vmatpush1.msra.mxu0 0.0
  %91 = vmatprep.subr.mxu0 0.0
  %92 = vmatpush1.msra.mxu0 0.0
  %93 = vmatprep.subr.mxu0 0.0
  %94 = vmatpush1.msra.mxu0 0.0
  %95 = vmatprep.subr.mxu0 0.0
  %96 = vmatpush1.msra.mxu0 0.0
  %97 = vmatprep.subr.mxu0 0.0
  %98 = vmatpush1.msra.mxu0 0.0
  %99 = vmatprep.subr.mxu0 0.0
  %100 = vmatpush1.msra.mxu0 0.0
  %101 = vmatprep.subr.mxu0 %v63
  %102 = vmatpush1.msra.mxu0 %v61
  %103 = vmatprep.subr.mxu0 0.0
  %104 = vmatpush2.msra.mxu0 0.0
  %105 = vmatprep.subr.mxu0 0.0
  %106 = vmatpush2.msra.mxu0 0.0
  %107 = vmatprep.subr.mxu0 0.0
  %108 = vmatpush2.msra.mxu0 0.0
  %109 = vmatprep.subr.mxu0 0.0
  %110 = vmatpush2.msra.mxu0 0.0
  %111 = vmatprep.subr.mxu0 0.0
  %112 = vmatpush2.msra.mxu0 0.0
  %113 = vmatprep.subr.mxu0 0.0
  %114 = vmatpush2.msra.mxu0 0.0
  %115 = vmatprep.subr.mxu0 0.0
  %116 = vmatpush2.msra.mxu0 0.0
  %117 = vmatprep.subr.mxu0 0.0
  %118 = vmatpush2.msra.mxu0 0.0
  %119 = vmatprep.subr.mxu0 0.0
  %120 = vmatpush2.msra.mxu0 0.0
  %121 = vmatprep.subr.mxu0 0.0
  %122 = vmatpush2.msra.mxu0 0.0
  %123 = vmatprep.subr.mxu0 0.0
  %124 = vmatpush2.msra.mxu0 0.0
  %125 = vmatprep.subr.mxu0 0.0
  %126 = vmatpush2.msra.mxu0 0.0
  %127 = vmatprep.subr.mxu0 0.0
  %128 = vmatpush2.msra.mxu0 0.0
  %129 = vmatprep.subr.mxu0 0.0
  %130 = vmatpush2.msra.mxu0 0.0
  %131 = vmatprep.subr.mxu0 0.0
  %132 = vmatpush2.msra.mxu0 0.0
  %133 = vmatprep.subr.mxu0 0.0
  %134 = vmatpush2.msra.mxu0 0.0
  %135 = vmatprep.mubr.f32.mxu0 0.0
  %136 = vmatmul.mubr.f32.gmra.mxu0 %v58
  %v137 = vpop.f32.mrf.mxu0
  %v138 = vadd.f32 0.0, %v137
  %v139 = vpop.f32.mrf.mxu0
  %v140 = vadd.f32 0.0, %v139
  %141 = vdwg.mxu0
  %142 = vmatprep.subr.mxu0 0.0
  %143 = vmatpush1.msra.mxu0 0.0
  %144 = vmatprep.subr.mxu0 0.0
  %145 = vmatpush1.msra.mxu0 0.0
  %146 = vmatprep.subr.mxu0 0.0
  %147 = vmatpush1.msra.mxu0 0.0
  %148 = vmatprep.subr.mxu0 0.0
  %149 = vmatpush1.msra.mxu0 0.0
  %150 = vmatprep.subr.mxu0 0.0
  %151 = vmatpush1.msra.mxu0 0.0
  %152 = vmatprep.subr.mxu0 0.0
  %153 = vmatpush1.msra.mxu0 0.0
  %154 = vmatprep.subr.mxu0 0.0
  %155 = vmatpush1.msra.mxu0 0.0
  %156 = vmatprep.subr.mxu0 0.0
  %157 = vmatpush1.msra.mxu0 0.0
  %158 = vmatprep.subr.mxu0 0.0
  %159 = vmatpush1.msra.mxu0 0.0
  %160 = vmatprep.subr.mxu0 0.0
  %161 = vmatpush1.msra.mxu0 0.0
  %162 = vmatprep.subr.mxu0 0.0
  %163 = vmatpush1.msra.mxu0 0.0
  %164 = vmatprep.subr.mxu0 0.0
  %165 = vmatpush1.msra.mxu0 0.0
  %166 = vmatprep.subr.mxu0 0.0
  %167 = vmatpush1.msra.mxu0 0.0
  %168 = vmatprep.subr.mxu0 0.0
  %169 = vmatpush1.msra.mxu0 0.0
  %170 = vmatprep.subr.mxu0 0.0
  %171 = vmatpush1.msra.mxu0 0.0
  %172 = vmatprep.subr.mxu0 %v67
  %173 = vmatpush1.msra.mxu0 %v65
  %174 = vmatprep.subr.mxu0 0.0
  %175 = vmatpush2.msra.mxu0 0.0
  %176 = vmatprep.subr.mxu0 0.0
  %177 = vmatpush2.msra.mxu0 0.0
  %178 = vmatprep.subr.mxu0 0.0
  %179 = vmatpush2.msra.mxu0 0.0
  %180 = vmatprep.subr.mxu0 0.0
  %181 = vmatpush2.msra.mxu0 0.0
  %182 = vmatprep.subr.mxu0 0.0
  %183 = vmatpush2.msra.mxu0 0.0
  %184 = vmatprep.subr.mxu0 0.0
  %185 = vmatpush2.msra.mxu0 0.0
  %186 = vmatprep.subr.mxu0 0.0
  %187 = vmatpush2.msra.mxu0 0.0
  %188 = vmatprep.subr.mxu0 0.0
  %189 = vmatpush2.msra.mxu0 0.0
  %190 = vmatprep.subr.mxu0 0.0
  %191 = vmatpush2.msra.mxu0 0.0
  %192 = vmatprep.subr.mxu0 0.0
  %193 = vmatpush2.msra.mxu0 0.0
  %194 = vmatprep.subr.mxu0 0.0
  %195 = vmatpush2.msra.mxu0 0.0
  %196 = vmatprep.subr.mxu0 0.0
  %197 = vmatpush2.msra.mxu0 0.0
  %198 = vmatprep.subr.mxu0 0.0
  %199 = vmatpush2.msra.mxu0 0.0
  %200 = vmatprep.subr.mxu0 0.0
  %201 = vmatpush2.msra.mxu0 0.0
  %202 = vmatprep.subr.mxu0 0.0
  %203 = vmatpush2.msra.mxu0 0.0
  %204 = vmatprep.subr.mxu0 0.0
  %205 = vmatpush2.msra.mxu0 0.0
  %206 = vmatprep.mubr.f32.mxu0 0.0
  %207 = vmatmul.mubr.f32.gmra.mxu0 %v58
  %v208 = vpop.f32.mrf.mxu0
  %v209 = vadd.f32 0.0, %v208
  %v210 = vpop.f32.mrf.mxu0
  %v211 = vadd.f32 0.0, %v210
  %212 = vdwg.mxu0
  %213 = vmatprep.subr.mxu0 0.0
  %214 = vmatpush1.msra.mxu0 0.0
  %215 = vmatprep.subr.mxu0 0.0
  %216 = vmatpush1.msra.mxu0 0.0
  %217 = vmatprep.subr.mxu0 0.0
  %218 = vmatpush1.msra.mxu0 0.0
  %219 = vmatprep.subr.mxu0 0.0
  %220 = vmatpush1.msra.mxu0 0.0
  %221 = vmatprep.subr.mxu0 0.0
  %222 = vmatpush1.msra.mxu0 0.0
  %223 = vmatprep.subr.mxu0 0.0
  %224 = vmatpush1.msra.mxu0 0.0
  %225 = vmatprep.subr.mxu0 0.0
  %226 = vmatpush1.msra.mxu0 0.0
  %227 = vmatprep.subr.mxu0 0.0
  %228 = vmatpush1.msra.mxu0 0.0
  %229 = vmatprep.subr.mxu0 0.0
  %230 = vmatpush1.msra.mxu0 0.0
  %231 = vmatprep.subr.mxu0 0.0
  %232 = vmatpush1.msra.mxu0 0.0
  %233 = vmatprep.subr.mxu0 0.0
  %234 = vmatpush1.msra.mxu0 0.0
  %235 = vmatprep.subr.mxu0 0.0
  %236 = vmatpush1.msra.mxu0 0.0
  %237 = vmatprep.subr.mxu0 0.0
  %238 = vmatpush1.msra.mxu0 0.0
  %239 = vmatprep.subr.mxu0 0.0
  %240 = vmatpush1.msra.mxu0 0.0
  %241 = vmatprep.subr.mxu0 0.0
  %242 = vmatpush1.msra.mxu0 0.0
  %243 = vmatprep.subr.mxu0 0.0
  %244 = vmatpush1.msra.mxu0 %v69
  %245 = vmatprep.subr.mxu0 0.0
  %246 = vmatpush2.msra.mxu0 0.0
  %247 = vmatprep.subr.mxu0 0.0
  %248 = vmatpush2.msra.mxu0 0.0
  %249 = vmatprep.subr.mxu0 0.0
  %250 = vmatpush2.msra.mxu0 0.0
  %251 = vmatprep.subr.mxu0 0.0
  %252 = vmatpush2.msra.mxu0 0.0
  %253 = vmatprep.subr.mxu0 0.0
  %254 = vmatpush2.msra.mxu0 0.0
  %255 = vmatprep.subr.mxu0 0.0
  %256 = vmatpush2.msra.mxu0 0.0
  %257 = vmatprep.subr.mxu0 0.0
  %258 = vmatpush2.msra.mxu0 0.0
  %259 = vmatprep.subr.mxu0 0.0
  %260 = vmatpush2.msra.mxu0 0.0
  %261 = vmatprep.subr.mxu0 0.0
  %262 = vmatpush2.msra.mxu0 0.0
  %263 = vmatprep.subr.mxu0 0.0
  %264 = vmatpush2.msra.mxu0 0.0
  %265 = vmatprep.subr.mxu0 0.0
  %266 = vmatpush2.msra.mxu0 0.0
  %267 = vmatprep.subr.mxu0 0.0
  %268 = vmatpush2.msra.mxu0 0.0
  %269 = vmatprep.subr.mxu0 0.0
  %270 = vmatpush2.msra.mxu0 0.0
  %271 = vmatprep.subr.mxu0 0.0
  %272 = vmatpush2.msra.mxu0 0.0
  %273 = vmatprep.subr.mxu0 0.0
  %274 = vmatpush2.msra.mxu0 0.0
  %275 = vmatprep.subr.mxu0 0.0
  %276 = vmatpush2.msra.mxu0 0.0
  %277 = vmatprep.mubr.f32.mxu0 0.0
  %278 = vmatmul.mubr.f32.gmra.mxu0 %v58
  %v279 = vpop.f32.mrf.mxu0
  %v280 = vadd.f32 0.0, %v279
  %v281 = vpop.f32.mrf.mxu0
  %282 = vdwg.mxu0
  %v286 = vcombine.high %v23, %v23
  %v287 = vcombine.high %v24, %v24
  %v289 = vsel %vm56, %v26, 0
  %v291 = vsel %vm60, %v23, 0
  %v293 = vsel %vm60, %v286, 0
  %v295 = vsel %vm60, %v24, 0
  %v297 = vsel %vm60, %v287, 0
  %v299 = vsel %vm60, %v25, 0
  %301 = vmatprep.subr.mxu0 0.0
  %302 = vmatpush1.msra.mxu0 0.0
  %303 = vmatprep.subr.mxu0 0.0
  %304 = vmatpush1.msra.mxu0 0.0
  %305 = vmatprep.subr.mxu0 0.0
  %306 = vmatpush1.msra.mxu0 0.0
  %307 = vmatprep.subr.mxu0 0.0
  %308 = vmatpush1.msra.mxu0 0.0
  %309 = vmatprep.subr.mxu0 0.0
  %310 = vmatpush1.msra.mxu0 0.0
  %311 = vmatprep.subr.mxu0 0.0
  %312 = vmatpush1.msra.mxu0 0.0
  %313 = vmatprep.subr.mxu0 0.0
  %314 = vmatpush1.msra.mxu0 0.0
  %315 = vmatprep.subr.mxu0 0.0
  %316 = vmatpush1.msra.mxu0 0.0
  %317 = vmatprep.subr.mxu0 0.0
  %318 = vmatpush1.msra.mxu0 0.0
  %319 = vmatprep.subr.mxu0 0.0
  %320 = vmatpush1.msra.mxu0 0.0
  %321 = vmatprep.subr.mxu0 0.0
  %322 = vmatpush1.msra.mxu0 0.0
  %323 = vmatprep.subr.mxu0 0.0
  %324 = vmatpush1.msra.mxu0 0.0
  %325 = vmatprep.subr.mxu0 0.0
  %326 = vmatpush1.msra.mxu0 0.0
  %327 = vmatprep.subr.mxu0 0.0
  %328 = vmatpush1.msra.mxu0 0.0
  %329 = vmatprep.subr.mxu0 0.0
  %330 = vmatpush1.msra.mxu0 0.0
  %331 = vmatprep.subr.mxu0 %v293
  %332 = vmatpush1.msra.mxu0 %v291
  %333 = vmatprep.subr.mxu0 0.0
  %334 = vmatpush2.msra.mxu0 0.0
  %335 = vmatprep.subr.mxu0 0.0
  %336 = vmatpush2.msra.mxu0 0.0
  %337 = vmatprep.subr.mxu0 0.0
  %338 = vmatpush2.msra.mxu0 0.0
  %339 = vmatprep.subr.mxu0 0.0
  %340 = vmatpush2.msra.mxu0 0.0
  %341 = vmatprep.subr.mxu0 0.0
  %342 = vmatpush2.msra.mxu0 0.0
  %343 = vmatprep.subr.mxu0 0.0
  %344 = vmatpush2.msra.mxu0 0.0
  %345 = vmatprep.subr.mxu0 0.0
  %346 = vmatpush2.msra.mxu0 0.0
  %347 = vmatprep.subr.mxu0 0.0
  %348 = vmatpush2.msra.mxu0 0.0
  %349 = vmatprep.subr.mxu0 0.0
  %350 = vmatpush2.msra.mxu0 0.0
  %351 = vmatprep.subr.mxu0 0.0
  %352 = vmatpush2.msra.mxu0 0.0
  %353 = vmatprep.subr.mxu0 0.0
  %354 = vmatpush2.msra.mxu0 0.0
  %355 = vmatprep.subr.mxu0 0.0
  %356 = vmatpush2.msra.mxu0 0.0
  %357 = vmatprep.subr.mxu0 0.0
  %358 = vmatpush2.msra.mxu0 0.0
  %359 = vmatprep.subr.mxu0 0.0
  %360 = vmatpush2.msra.mxu0 0.0
  %361 = vmatprep.subr.mxu0 0.0
  %362 = vmatpush2.msra.mxu0 0.0
  %363 = vmatprep.subr.mxu0 0.0
  %364 = vmatpush2.msra.mxu0 0.0
  %365 = vmatprep.mubr.f32.mxu0 0.0
  %366 = vmatmul.mubr.f32.gmra.mxu0 %v289
  %v367 = vpop.f32.mrf.mxu0
  %v368 = vadd.f32 %v138, %v367
  %v369 = vpop.f32.mrf.mxu0
  %v370 = vadd.f32 %v140, %v369
  %371 = vdwg.mxu0
  %372 = vmatprep.subr.mxu0 0.0
  %373 = vmatpush1.msra.mxu0 0.0
  %374 = vmatprep.subr.mxu0 0.0
  %375 = vmatpush1.msra.mxu0 0.0
  %376 = vmatprep.subr.mxu0 0.0
  %377 = vmatpush1.msra.mxu0 0.0
  %378 = vmatprep.subr.mxu0 0.0
  %379 = vmatpush1.msra.mxu0 0.0
  %380 = vmatprep.subr.mxu0 0.0
  %381 = vmatpush1.msra.mxu0 0.0
  %382 = vmatprep.subr.mxu0 0.0
  %383 = vmatpush1.msra.mxu0 0.0
  %384 = vmatprep.subr.mxu0 0.0
  %385 = vmatpush1.msra.mxu0 0.0
  %386 = vmatprep.subr.mxu0 0.0
  %387 = vmatpush1.msra.mxu0 0.0
  %388 = vmatprep.subr.mxu0 0.0
  %389 = vmatpush1.msra.mxu0 0.0
  %390 = vmatprep.subr.mxu0 0.0
  %391 = vmatpush1.msra.mxu0 0.0
  %392 = vmatprep.subr.mxu0 0.0
  %393 = vmatpush1.msra.mxu0 0.0
  %394 = vmatprep.subr.mxu0 0.0
  %395 = vmatpush1.msra.mxu0 0.0
  %396 = vmatprep.subr.mxu0 0.0
  %397 = vmatpush1.msra.mxu0 0.0
  %398 = vmatprep.subr.mxu0 0.0
  %399 = vmatpush1.msra.mxu0 0.0
  %400 = vmatprep.subr.mxu0 0.0
  %401 = vmatpush1.msra.mxu0 0.0
  %402 = vmatprep.subr.mxu0 %v297
  %403 = vmatpush1.msra.mxu0 %v295
  %404 = vmatprep.subr.mxu0 0.0
  %405 = vmatpush2.msra.mxu0 0.0
  %406 = vmatprep.subr.mxu0 0.0
  %407 = vmatpush2.msra.mxu0 0.0
  %408 = vmatprep.subr.mxu0 0.0
  %409 = vmatpush2.msra.mxu0 0.0
  %410 = vmatprep.subr.mxu0 0.0
  %411 = vmatpush2.msra.mxu0 0.0
  %412 = vmatprep.subr.mxu0 0.0
  %413 = vmatpush2.msra.mxu0 0.0
  %414 = vmatprep.subr.mxu0 0.0
  %415 = vmatpush2.msra.mxu0 0.0
  %416 = vmatprep.subr.mxu0 0.0
  %417 = vmatpush2.msra.mxu0 0.0
  %418 = vmatprep.subr.mxu0 0.0
  %419 = vmatpush2.msra.mxu0 0.0
  %420 = vmatprep.subr.mxu0 0.0
  %421 = vmatpush2.msra.mxu0 0.0
  %422 = vmatprep.subr.mxu0 0.0
  %423 = vmatpush2.msra.mxu0 0.0
  %424 = vmatprep.subr.mxu0 0.0
  %425 = vmatpush2.msra.mxu0 0.0
  %426 = vmatprep.subr.mxu0 0.0
  %427 = vmatpush2.msra.mxu0 0.0
  %428 = vmatprep.subr.mxu0 0.0
  %429 = vmatpush2.msra.mxu0 0.0
  %430 = vmatprep.subr.mxu0 0.0
  %431 = vmatpush2.msra.mxu0 0.0
  %432 = vmatprep.subr.mxu0 0.0
  %433 = vmatpush2.msra.mxu0 0.0
  %434 = vmatprep.subr.mxu0 0.0
  %435 = vmatpush2.msra.mxu0 0.0
  %436 = vmatprep.mubr.f32.mxu0 0.0
  %437 = vmatmul.mubr.f32.gmra.mxu0 %v289
  %v438 = vpop.f32.mrf.mxu0
  %v439 = vadd.f32 %v209, %v438
  %v440 = vpop.f32.mrf.mxu0
  %v441 = vadd.f32 %v211, %v440
  %442 = vdwg.mxu0
  %443 = vmatprep.subr.mxu0 0.0
  %444 = vmatpush1.msra.mxu0 0.0
  %445 = vmatprep.subr.mxu0 0.0
  %446 = vmatpush1.msra.mxu0 0.0
  %447 = vmatprep.subr.mxu0 0.0
  %448 = vmatpush1.msra.mxu0 0.0
  %449 = vmatprep.subr.mxu0 0.0
  %450 = vmatpush1.msra.mxu0 0.0
  %451 = vmatprep.subr.mxu0 0.0
  %452 = vmatpush1.msra.mxu0 0.0
  %453 = vmatprep.subr.mxu0 0.0
  %454 = vmatpush1.msra.mxu0 0.0
  %455 = vmatprep.subr.mxu0 0.0
  %456 = vmatpush1.msra.mxu0 0.0
  %457 = vmatprep.subr.mxu0 0.0
  %458 = vmatpush1.msra.mxu0 0.0
  %459 = vmatprep.subr.mxu0 0.0
  %460 = vmatpush1.msra.mxu0 0.0
  %461 = vmatprep.subr.mxu0 0.0
  %462 = vmatpush1.msra.mxu0 0.0
  %463 = vmatprep.subr.mxu0 0.0
  %464 = vmatpush1.msra.mxu0 0.0
  %465 = vmatprep.subr.mxu0 0.0
  %466 = vmatpush1.msra.mxu0 0.0
  %467 = vmatprep.subr.mxu0 0.0
  %468 = vmatpush1.msra.mxu0 0.0
  %469 = vmatprep.subr.mxu0 0.0
  %470 = vmatpush1.msra.mxu0 0.0
  %471 = vmatprep.subr.mxu0 0.0
  %472 = vmatpush1.msra.mxu0 0.0
  %473 = vmatprep.subr.mxu0 0.0
  %474 = vmatpush1.msra.mxu0 %v299
  %475 = vmatprep.subr.mxu0 0.0
  %476 = vmatpush2.msra.mxu0 0.0
  %477 = vmatprep.subr.mxu0 0.0
  %478 = vmatpush2.msra.mxu0 0.0
  %479 = vmatprep.subr.mxu0 0.0
  %480 = vmatpush2.msra.mxu0 0.0
  %481 = vmatprep.subr.mxu0 0.0
  %482 = vmatpush2.msra.mxu0 0.0
  %483 = vmatprep.subr.mxu0 0.0
  %484 = vmatpush2.msra.mxu0 0.0
  %485 = vmatprep.subr.mxu0 0.0
  %486 = vmatpush2.msra.mxu0 0.0
  %487 = vmatprep.subr.mxu0 0.0
  %488 = vmatpush2.msra.mxu0 0.0
  %489 = vmatprep.subr.mxu0 0.0
  %490 = vmatpush2.msra.mxu0 0.0
  %491 = vmatprep.subr.mxu0 0.0
  %492 = vmatpush2.msra.mxu0 0.0
  %493 = vmatprep.subr.mxu0 0.0
  %494 = vmatpush2.msra.mxu0 0.0
  %495 = vmatprep.subr.mxu0 0.0
  %496 = vmatpush2.msra.mxu0 0.0
  %497 = vmatprep.subr.mxu0 0.0
  %498 = vmatpush2.msra.mxu0 0.0
  %499 = vmatprep.subr.mxu0 0.0
  %500 = vmatpush2.msra.mxu0 0.0
  %501 = vmatprep.subr.mxu0 0.0
  %502 = vmatpush2.msra.mxu0 0.0
  %503 = vmatprep.subr.mxu0 0.0
  %504 = vmatpush2.msra.mxu0 0.0
  %505 = vmatprep.subr.mxu0 0.0
  %506 = vmatpush2.msra.mxu0 0.0
  %507 = vmatprep.mubr.f32.mxu0 0.0
  %508 = vmatmul.mubr.f32.gmra.mxu0 %v289
  %v509 = vpop.f32.mrf.mxu0
  %v510 = vadd.f32 %v280, %v509
  %v511 = vpop.f32.mrf.mxu0
  %512 = vdwg.mxu0
  %v513 = vld [vmem:[#allocation2] sm:$0xff]
  %v514 = vld [vmem:[#allocation2 + $0x8] sm:$0xff]
  %v515 = vld [vmem:[#allocation2 + $0x10] sm:$0xff]
  %s516 = scalar_lea.vmem %s1, 16
  %v517 = vld [vmem:[%s516] sm:$0xff]
  %v521 = vcombine.high %v513, %v513
  %v522 = vcombine.high %v514, %v514
  %v523 = vcombine.high %v515, %v515
  %524 = vrot.lane.b32.xlu0 %v513, 126
  %v525 = vpop.permute.xlu0 %524
  %526 = vrot.lane.b32.xlu0 %v521, 126
  %v527 = vpop.permute.xlu0 %526
  %528 = vrot.lane.b32.xlu0 %v514, 126
  %v529 = vpop.permute.xlu0 %528
  %530 = vrot.lane.b32.xlu0 %v522, 126
  %v531 = vpop.permute.xlu0 %530
  %532 = vrot.lane.b32.xlu0 %v515, 126
  %v533 = vpop.permute.xlu0 %532
  %534 = vrot.lane.b32.xlu0 %v523, 126
  %v535 = vpop.permute.xlu0 %534
  %vm536 = vcmask 1031168
  %v537 = vsel %vm536, %v525, %v527
  %v538 = vsel %vm536, %v527, %v529
  %v539 = vsel %vm536, %v529, %v531
  %v540 = vsel %vm536, %v531, %v533
  %v541 = vsel %vm536, %v533, %v535
  %v543 = vsel %vm56, %v517, 0
  %v545 = vsel %vm60, %v537, 0
  %v547 = vsel %vm60, %v538, 0
  %v549 = vsel %vm60, %v539, 0
  %v551 = vsel %vm60, %v540, 0
  %v553 = vsel %vm60, %v541, 0
  %555 = vmatprep.subr.mxu0 0.0
  %556 = vmatpush1.msra.mxu0 0.0
  %557 = vmatprep.subr.mxu0 0.0
  %558 = vmatpush1.msra.mxu0 0.0
  %559 = vmatprep.subr.mxu0 0.0
  %560 = vmatpush1.msra.mxu0 0.0
  %561 = vmatprep.subr.mxu0 0.0
  %562 = vmatpush1.msra.mxu0 0.0
  %563 = vmatprep.subr.mxu0 0.0
  %564 = vmatpush1.msra.mxu0 0.0
  %565 = vmatprep.subr.mxu0 0.0
  %566 = vmatpush1.msra.mxu0 0.0
  %567 = vmatprep.subr.mxu0 0.0
  %568 = vmatpush1.msra.mxu0 0.0
  %569 = vmatprep.subr.mxu0 0.0
  %570 = vmatpush1.msra.mxu0 0.0
  %571 = vmatprep.subr.mxu0 0.0
  %572 = vmatpush1.msra.mxu0 0.0
  %573 = vmatprep.subr.mxu0 0.0
  %574 = vmatpush1.msra.mxu0 0.0
  %575 = vmatprep.subr.mxu0 0.0
  %576 = vmatpush1.msra.mxu0 0.0
  %577 = vmatprep.subr.mxu0 0.0
  %578 = vmatpush1.msra.mxu0 0.0
  %579 = vmatprep.subr.mxu0 0.0
  %580 = vmatpush1.msra.mxu0 0.0
  %581 = vmatprep.subr.mxu0 0.0
  %582 = vmatpush1.msra.mxu0 0.0
  %583 = vmatprep.subr.mxu0 0.0
  %584 = vmatpush1.msra.mxu0 0.0
  %585 = vmatprep.subr.mxu0 %v547
  %586 = vmatpush1.msra.mxu0 %v545
  %587 = vmatprep.subr.mxu0 0.0
  %588 = vmatpush2.msra.mxu0 0.0
  %589 = vmatprep.subr.mxu0 0.0
  %590 = vmatpush2.msra.mxu0 0.0
  %591 = vmatprep.subr.mxu0 0.0
  %592 = vmatpush2.msra.mxu0 0.0
  %593 = vmatprep.subr.mxu0 0.0
  %594 = vmatpush2.msra.mxu0 0.0
  %595 = vmatprep.subr.mxu0 0.0
  %596 = vmatpush2.msra.mxu0 0.0
  %597 = vmatprep.subr.mxu0 0.0
  %598 = vmatpush2.msra.mxu0 0.0
  %599 = vmatprep.subr.mxu0 0.0
  %600 = vmatpush2.msra.mxu0 0.0
  %601 = vmatprep.subr.mxu0 0.0
  %602 = vmatpush2.msra.mxu0 0.0
  %603 = vmatprep.subr.mxu0 0.0
  %604 = vmatpush2.msra.mxu0 0.0
  %605 = vmatprep.subr.mxu0 0.0
  %606 = vmatpush2.msra.mxu0 0.0
  %607 = vmatprep.subr.mxu0 0.0
  %608 = vmatpush2.msra.mxu0 0.0
  %609 = vmatprep.subr.mxu0 0.0
  %610 = vmatpush2.msra.mxu0 0.0
  %611 = vmatprep.subr.mxu0 0.0
  %612 = vmatpush2.msra.mxu0 0.0
  %613 = vmatprep.subr.mxu0 0.0
  %614 = vmatpush2.msra.mxu0 0.0
  %615 = vmatprep.subr.mxu0 0.0
  %616 = vmatpush2.msra.mxu0 0.0
  %617 = vmatprep.subr.mxu0 0.0
  %618 = vmatpush2.msra.mxu0 0.0
  %619 = vmatprep.mubr.f32.mxu0 0.0
  %620 = vmatmul.mubr.f32.gmra.mxu0 %v543
  %v621 = vpop.f32.mrf.mxu0
  %v622 = vadd.f32 0.0, %v621
  %v623 = vpop.f32.mrf.mxu0
  %v624 = vadd.f32 0.0, %v623
  %625 = vdwg.mxu0
  %626 = vmatprep.subr.mxu0 0.0
  %627 = vmatpush1.msra.mxu0 0.0
  %628 = vmatprep.subr.mxu0 0.0
  %629 = vmatpush1.msra.mxu0 0.0
  %630 = vmatprep.subr.mxu0 0.0
  %631 = vmatpush1.msra.mxu0 0.0
  %632 = vmatprep.subr.mxu0 0.0
  %633 = vmatpush1.msra.mxu0 0.0
  %634 = vmatprep.subr.mxu0 0.0
  %635 = vmatpush1.msra.mxu0 0.0
  %636 = vmatprep.subr.mxu0 0.0
  %637 = vmatpush1.msra.mxu0 0.0
  %638 = vmatprep.subr.mxu0 0.0
  %639 = vmatpush1.msra.mxu0 0.0
  %640 = vmatprep.subr.mxu0 0.0
  %641 = vmatpush1.msra.mxu0 0.0
  %642 = vmatprep.subr.mxu0 0.0
  %643 = vmatpush1.msra.mxu0 0.0
  %644 = vmatprep.subr.mxu0 0.0
  %645 = vmatpush1.msra.mxu0 0.0
  %646 = vmatprep.subr.mxu0 0.0
  %647 = vmatpush1.msra.mxu0 0.0
  %648 = vmatprep.subr.mxu0 0.0
  %649 = vmatpush1.msra.mxu0 0.0
  %650 = vmatprep.subr.mxu0 0.0
  %651 = vmatpush1.msra.mxu0 0.0
  %652 = vmatprep.subr.mxu0 0.0
  %653 = vmatpush1.msra.mxu0 0.0
  %654 = vmatprep.subr.mxu0 0.0
  %655 = vmatpush1.msra.mxu0 0.0
  %656 = vmatprep.subr.mxu0 %v551
  %657 = vmatpush1.msra.mxu0 %v549
  %658 = vmatprep.subr.mxu0 0.0
  %659 = vmatpush2.msra.mxu0 0.0
  %660 = vmatprep.subr.mxu0 0.0
  %661 = vmatpush2.msra.mxu0 0.0
  %662 = vmatprep.subr.mxu0 0.0
  %663 = vmatpush2.msra.mxu0 0.0
  %664 = vmatprep.subr.mxu0 0.0
  %665 = vmatpush2.msra.mxu0 0.0
  %666 = vmatprep.subr.mxu0 0.0
  %667 = vmatpush2.msra.mxu0 0.0
  %668 = vmatprep.subr.mxu0 0.0
  %669 = vmatpush2.msra.mxu0 0.0
  %670 = vmatprep.subr.mxu0 0.0
  %671 = vmatpush2.msra.mxu0 0.0
  %672 = vmatprep.subr.mxu0 0.0
  %673 = vmatpush2.msra.mxu0 0.0
  %674 = vmatprep.subr.mxu0 0.0
  %675 = vmatpush2.msra.mxu0 0.0
  %676 = vmatprep.subr.mxu0 0.0
  %677 = vmatpush2.msra.mxu0 0.0
  %678 = vmatprep.subr.mxu0 0.0
  %679 = vmatpush2.msra.mxu0 0.0
  %680 = vmatprep.subr.mxu0 0.0
  %681 = vmatpush2.msra.mxu0 0.0
  %682 = vmatprep.subr.mxu0 0.0
  %683 = vmatpush2.msra.mxu0 0.0
  %684 = vmatprep.subr.mxu0 0.0
  %685 = vmatpush2.msra.mxu0 0.0
  %686 = vmatprep.subr.mxu0 0.0
  %687 = vmatpush2.msra.mxu0 0.0
  %688 = vmatprep.subr.mxu0 0.0
  %689 = vmatpush2.msra.mxu0 0.0
  %690 = vmatprep.mubr.f32.mxu0 0.0
  %691 = vmatmul.mubr.f32.gmra.mxu0 %v543
  %v692 = vpop.f32.mrf.mxu0
  %v693 = vadd.f32 0.0, %v692
  %v694 = vpop.f32.mrf.mxu0
  %v695 = vadd.f32 0.0, %v694
  %696 = vdwg.mxu0
  %697 = vmatprep.subr.mxu0 0.0
  %698 = vmatpush1.msra.mxu0 0.0
  %699 = vmatprep.subr.mxu0 0.0
  %700 = vmatpush1.msra.mxu0 0.0
  %701 = vmatprep.subr.mxu0 0.0
  %702 = vmatpush1.msra.mxu0 0.0
  %703 = vmatprep.subr.mxu0 0.0
  %704 = vmatpush1.msra.mxu0 0.0
  %705 = vmatprep.subr.mxu0 0.0
  %706 = vmatpush1.msra.mxu0 0.0
  %707 = vmatprep.subr.mxu0 0.0
  %708 = vmatpush1.msra.mxu0 0.0
  %709 = vmatprep.subr.mxu0 0.0
  %710 = vmatpush1.msra.mxu0 0.0
  %711 = vmatprep.subr.mxu0 0.0
  %712 = vmatpush1.msra.mxu0 0.0
  %713 = vmatprep.subr.mxu0 0.0
  %714 = vmatpush1.msra.mxu0 0.0
  %715 = vmatprep.subr.mxu0 0.0
  %716 = vmatpush1.msra.mxu0 0.0
  %717 = vmatprep.subr.mxu0 0.0
  %718 = vmatpush1.msra.mxu0 0.0
  %719 = vmatprep.subr.mxu0 0.0
  %720 = vmatpush1.msra.mxu0 0.0
  %721 = vmatprep.subr.mxu0 0.0
  %722 = vmatpush1.msra.mxu0 0.0
  %723 = vmatprep.subr.mxu0 0.0
  %724 = vmatpush1.msra.mxu0 0.0
  %725 = vmatprep.subr.mxu0 0.0
  %726 = vmatpush1.msra.mxu0 0.0
  %727 = vmatprep.subr.mxu0 0.0
  %728 = vmatpush1.msra.mxu0 %v553
  %729 = vmatprep.subr.mxu0 0.0
  %730 = vmatpush2.msra.mxu0 0.0
  %731 = vmatprep.subr.mxu0 0.0
  %732 = vmatpush2.msra.mxu0 0.0
  %733 = vmatprep.subr.mxu0 0.0
  %734 = vmatpush2.msra.mxu0 0.0
  %735 = vmatprep.subr.mxu0 0.0
  %736 = vmatpush2.msra.mxu0 0.0
  %737 = vmatprep.subr.mxu0 0.0
  %738 = vmatpush2.msra.mxu0 0.0
  %739 = vmatprep.subr.mxu0 0.0
  %740 = vmatpush2.msra.mxu0 0.0
  %741 = vmatprep.subr.mxu0 0.0
  %742 = vmatpush2.msra.mxu0 0.0
  %743 = vmatprep.subr.mxu0 0.0
  %744 = vmatpush2.msra.mxu0 0.0
  %745 = vmatprep.subr.mxu0 0.0
  %746 = vmatpush2.msra.mxu0 0.0
  %747 = vmatprep.subr.mxu0 0.0
  %748 = vmatpush2.msra.mxu0 0.0
  %749 = vmatprep.subr.mxu0 0.0
  %750 = vmatpush2.msra.mxu0 0.0
  %751 = vmatprep.subr.mxu0 0.0
  %752 = vmatpush2.msra.mxu0 0.0
  %753 = vmatprep.subr.mxu0 0.0
  %754 = vmatpush2.msra.mxu0 0.0
  %755 = vmatprep.subr.mxu0 0.0
  %756 = vmatpush2.msra.mxu0 0.0
  %757 = vmatprep.subr.mxu0 0.0
  %758 = vmatpush2.msra.mxu0 0.0
  %759 = vmatprep.subr.mxu0 0.0
  %760 = vmatpush2.msra.mxu0 0.0
  %761 = vmatprep.mubr.f32.mxu0 0.0
  %762 = vmatmul.mubr.f32.gmra.mxu0 %v543
  %v763 = vpop.f32.mrf.mxu0
  %v764 = vadd.f32 0.0, %v763
  %v765 = vpop.f32.mrf.mxu0
  %766 = vdwg.mxu0
  %v767 = vadd.f32 %v368, %v622
  %v768 = vadd.f32 %v370, %v624
  %v769 = vadd.f32 %v439, %v693
  %v770 = vadd.f32 %v441, %v695
  %v771 = vadd.f32 %v510, %v764
  %v772 = vld [vmem:[#allocation2] sm:$0xff]
  %v773 = vld [vmem:[#allocation2 + $0x8] sm:$0xff]
  %v774 = vld [vmem:[#allocation2 + $0x10] sm:$0xff]
  %s775 = scalar_lea.vmem %s1, 24
  %v776 = vld [vmem:[%s775] sm:$0xff]
  %v780 = vcombine.high %v772, %v772
  %v781 = vcombine.high %v773, %v773
  %v782 = vcombine.high %v774, %v774
  %783 = vrot.lane.b32.xlu0 %v772, 110
  %v784 = vpop.permute.xlu0 %783
  %785 = vrot.lane.b32.xlu0 %v780, 110
  %v786 = vpop.permute.xlu0 %785
  %787 = vrot.lane.b32.xlu0 %v773, 110
  %v788 = vpop.permute.xlu0 %787
  %789 = vrot.lane.b32.xlu0 %v781, 110
  %v790 = vpop.permute.xlu0 %789
  %791 = vrot.lane.b32.xlu0 %v774, 110
  %v792 = vpop.permute.xlu0 %791
  %793 = vrot.lane.b32.xlu0 %v782, 110
  %v794 = vpop.permute.xlu0 %793
  %vm795 = vcmask 900096
  %v796 = vsel %vm795, %v784, %v786
  %v797 = vsel %vm795, %v786, %v788
  %v798 = vsel %vm795, %v788, %v790
  %v799 = vsel %vm795, %v790, %v792
  %v800 = vsel %vm795, %v792, %v794
  %v802 = vsel %vm56, %v776, 0
  %v804 = vsel %vm60, %v796, 0
  %v806 = vsel %vm60, %v797, 0
  %v808 = vsel %vm60, %v798, 0
  %v810 = vsel %vm60, %v799, 0
  %v812 = vsel %vm60, %v800, 0
  %814 = vmatprep.subr.mxu0 0.0
  %815 = vmatpush1.msra.mxu0 0.0
  %816 = vmatprep.subr.mxu0 0.0
  %817 = vmatpush1.msra.mxu0 0.0
  %818 = vmatprep.subr.mxu0 0.0
  %819 = vmatpush1.msra.mxu0 0.0
  %820 = vmatprep.subr.mxu0 0.0
  %821 = vmatpush1.msra.mxu0 0.0
  %822 = vmatprep.subr.mxu0 0.0
  %823 = vmatpush1.msra.mxu0 0.0
  %824 = vmatprep.subr.mxu0 0.0
  %825 = vmatpush1.msra.mxu0 0.0
  %826 = vmatprep.subr.mxu0 0.0
  %827 = vmatpush1.msra.mxu0 0.0
  %828 = vmatprep.subr.mxu0 0.0
  %829 = vmatpush1.msra.mxu0 0.0
  %830 = vmatprep.subr.mxu0 0.0
  %831 = vmatpush1.msra.mxu0 0.0
  %832 = vmatprep.subr.mxu0 0.0
  %833 = vmatpush1.msra.mxu0 0.0
  %834 = vmatprep.subr.mxu0 0.0
  %835 = vmatpush1.msra.mxu0 0.0
  %836 = vmatprep.subr.mxu0 0.0
  %837 = vmatpush1.msra.mxu0 0.0
  %838 = vmatprep.subr.mxu0 0.0
  %839 = vmatpush1.msra.mxu0 0.0
  %840 = vmatprep.subr.mxu0 0.0
  %841 = vmatpush1.msra.mxu0 0.0
  %842 = vmatprep.subr.mxu0 0.0
  %843 = vmatpush1.msra.mxu0 0.0
  %844 = vmatprep.subr.mxu0 %v806
  %845 = vmatpush1.msra.mxu0 %v804
  %846 = vmatprep.subr.mxu0 0.0
  %847 = vmatpush2.msra.mxu0 0.0
  %848 = vmatprep.subr.mxu0 0.0
  %849 = vmatpush2.msra.mxu0 0.0
  %850 = vmatprep.subr.mxu0 0.0
  %851 = vmatpush2.msra.mxu0 0.0
  %852 = vmatprep.subr.mxu0 0.0
  %853 = vmatpush2.msra.mxu0 0.0
  %854 = vmatprep.subr.mxu0 0.0
  %855 = vmatpush2.msra.mxu0 0.0
  %856 = vmatprep.subr.mxu0 0.0
  %857 = vmatpush2.msra.mxu0 0.0
  %858 = vmatprep.subr.mxu0 0.0
  %859 = vmatpush2.msra.mxu0 0.0
  %860 = vmatprep.subr.mxu0 0.0
  %861 = vmatpush2.msra.mxu0 0.0
  %862 = vmatprep.subr.mxu0 0.0
  %863 = vmatpush2.msra.mxu0 0.0
  %864 = vmatprep.subr.mxu0 0.0
  %865 = vmatpush2.msra.mxu0 0.0
  %866 = vmatprep.subr.mxu0 0.0
  %867 = vmatpush2.msra.mxu0 0.0
  %868 = vmatprep.subr.mxu0 0.0
  %869 = vmatpush2.msra.mxu0 0.0
  %870 = vmatprep.subr.mxu0 0.0
  %871 = vmatpush2.msra.mxu0 0.0
  %872 = vmatprep.subr.mxu0 0.0
  %873 = vmatpush2.msra.mxu0 0.0
  %874 = vmatprep.subr.mxu0 0.0
  %875 = vmatpush2.msra.mxu0 0.0
  %876 = vmatprep.subr.mxu0 0.0
  %877 = vmatpush2.msra.mxu0 0.0
  %878 = vmatprep.mubr.f32.mxu0 0.0
  %879 = vmatmul.mubr.f32.gmra.mxu0 %v802
  %v880 = vpop.f32.mrf.mxu0
  %v881 = vadd.f32 0.0, %v880
  %v882 = vpop.f32.mrf.mxu0
  %v883 = vadd.f32 0.0, %v882
  %884 = vdwg.mxu0
  %885 = vmatprep.subr.mxu0 0.0
  %886 = vmatpush1.msra.mxu0 0.0
  %887 = vmatprep.subr.mxu0 0.0
  %888 = vmatpush1.msra.mxu0 0.0
  %889 = vmatprep.subr.mxu0 0.0
  %890 = vmatpush1.msra.mxu0 0.0
  %891 = vmatprep.subr.mxu0 0.0
  %892 = vmatpush1.msra.mxu0 0.0
  %893 = vmatprep.subr.mxu0 0.0
  %894 = vmatpush1.msra.mxu0 0.0
  %895 = vmatprep.subr.mxu0 0.0
  %896 = vmatpush1.msra.mxu0 0.0
  %897 = vmatprep.subr.mxu0 0.0
  %898 = vmatpush1.msra.mxu0 0.0
  %899 = vmatprep.subr.mxu0 0.0
  %900 = vmatpush1.msra.mxu0 0.0
  %901 = vmatprep.subr.mxu0 0.0
  %902 = vmatpush1.msra.mxu0 0.0
  %903 = vmatprep.subr.mxu0 0.0
  %904 = vmatpush1.msra.mxu0 0.0
  %905 = vmatprep.subr.mxu0 0.0
  %906 = vmatpush1.msra.mxu0 0.0
  %907 = vmatprep.subr.mxu0 0.0
  %908 = vmatpush1.msra.mxu0 0.0
  %909 = vmatprep.subr.mxu0 0.0
  %910 = vmatpush1.msra.mxu0 0.0
  %911 = vmatprep.subr.mxu0 0.0
  %912 = vmatpush1.msra.mxu0 0.0
  %913 = vmatprep.subr.mxu0 0.0
  %914 = vmatpush1.msra.mxu0 0.0
  %915 = vmatprep.subr.mxu0 %v810
  %916 = vmatpush1.msra.mxu0 %v808
  %917 = vmatprep.subr.mxu0 0.0
  %918 = vmatpush2.msra.mxu0 0.0
  %919 = vmatprep.subr.mxu0 0.0
  %920 = vmatpush2.msra.mxu0 0.0
  %921 = vmatprep.subr.mxu0 0.0
  %922 = vmatpush2.msra.mxu0 0.0
  %923 = vmatprep.subr.mxu0 0.0
  %924 = vmatpush2.msra.mxu0 0.0
  %925 = vmatprep.subr.mxu0 0.0
  %926 = vmatpush2.msra.mxu0 0.0
  %927 = vmatprep.subr.mxu0 0.0
  %928 = vmatpush2.msra.mxu0 0.0
  %929 = vmatprep.subr.mxu0 0.0
  %930 = vmatpush2.msra.mxu0 0.0
  %931 = vmatprep.subr.mxu0 0.0
  %932 = vmatpush2.msra.mxu0 0.0
  %933 = vmatprep.subr.mxu0 0.0
  %934 = vmatpush2.msra.mxu0 0.0
  %935 = vmatprep.subr.mxu0 0.0
  %936 = vmatpush2.msra.mxu0 0.0
  %937 = vmatprep.subr.mxu0 0.0
  %938 = vmatpush2.msra.mxu0 0.0
  %939 = vmatprep.subr.mxu0 0.0
  %940 = vmatpush2.msra.mxu0 0.0
  %941 = vmatprep.subr.mxu0 0.0
  %942 = vmatpush2.msra.mxu0 0.0
  %943 = vmatprep.subr.mxu0 0.0
  %944 = vmatpush2.msra.mxu0 0.0
  %945 = vmatprep.subr.mxu0 0.0
  %946 = vmatpush2.msra.mxu0 0.0
  %947 = vmatprep.subr.mxu0 0.0
  %948 = vmatpush2.msra.mxu0 0.0
  %949 = vmatprep.mubr.f32.mxu0 0.0
  %950 = vmatmul.mubr.f32.gmra.mxu0 %v802
  %v951 = vpop.f32.mrf.mxu0
  %v952 = vadd.f32 0.0, %v951
  %v953 = vpop.f32.mrf.mxu0
  %v954 = vadd.f32 0.0, %v953
  %955 = vdwg.mxu0
  %956 = vmatprep.subr.mxu0 0.0
  %957 = vmatpush1.msra.mxu0 0.0
  %958 = vmatprep.subr.mxu0 0.0
  %959 = vmatpush1.msra.mxu0 0.0
  %960 = vmatprep.subr.mxu0 0.0
  %961 = vmatpush1.msra.mxu0 0.0
  %962 = vmatprep.subr.mxu0 0.0
  %963 = vmatpush1.msra.mxu0 0.0
  %964 = vmatprep.subr.mxu0 0.0
  %965 = vmatpush1.msra.mxu0 0.0
  %966 = vmatprep.subr.mxu0 0.0
  %967 = vmatpush1.msra.mxu0 0.0
  %968 = vmatprep.subr.mxu0 0.0
  %969 = vmatpush1.msra.mxu0 0.0
  %970 = vmatprep.subr.mxu0 0.0
  %971 = vmatpush1.msra.mxu0 0.0
  %972 = vmatprep.subr.mxu0 0.0
  %973 = vmatpush1.msra.mxu0 0.0
  %974 = vmatprep.subr.mxu0 0.0
  %975 = vmatpush1.msra.mxu0 0.0
  %976 = vmatprep.subr.mxu0 0.0
  %977 = vmatpush1.msra.mxu0 0.0
  %978 = vmatprep.subr.mxu0 0.0
  %979 = vmatpush1.msra.mxu0 0.0
  %980 = vmatprep.subr.mxu0 0.0
  %981 = vmatpush1.msra.mxu0 0.0
  %982 = vmatprep.subr.mxu0 0.0
  %983 = vmatpush1.msra.mxu0 0.0
  %984 = vmatprep.subr.mxu0 0.0
  %985 = vmatpush1.msra.mxu0 0.0
  %986 = vmatprep.subr.mxu0 0.0
  %987 = vmatpush1.msra.mxu0 %v812
  %988 = vmatprep.subr.mxu0 0.0
  %989 = vmatpush2.msra.mxu0 0.0
  %990 = vmatprep.subr.mxu0 0.0
  %991 = vmatpush2.msra.mxu0 0.0
  %992 = vmatprep.subr.mxu0 0.0
  %993 = vmatpush2.msra.mxu0 0.0
  %994 = vmatprep.subr.mxu0 0.0
  %995 = vmatpush2.msra.mxu0 0.0
  %996 = vmatprep.subr.mxu0 0.0
  %997 = vmatpush2.msra.mxu0 0.0
  %998 = vmatprep.subr.mxu0 0.0
  %999 = vmatpush2.msra.mxu0 0.0
  %1000 = vmatprep.subr.mxu0 0.0
  %1001 = vmatpush2.msra.mxu0 0.0
  %1002 = vmatprep.subr.mxu0 0.0
  %1003 = vmatpush2.msra.mxu0 0.0
  %1004 = vmatprep.subr.mxu0 0.0
  %1005 = vmatpush2.msra.mxu0 0.0
  %1006 = vmatprep.subr.mxu0 0.0
  %1007 = vmatpush2.msra.mxu0 0.0
  %1008 = vmatprep.subr.mxu0 0.0
  %1009 = vmatpush2.msra.mxu0 0.0
  %1010 = vmatprep.subr.mxu0 0.0
  %1011 = vmatpush2.msra.mxu0 0.0
  %1012 = vmatprep.subr.mxu0 0.0
  %1013 = vmatpush2.msra.mxu0 0.0
  %1014 = vmatprep.subr.mxu0 0.0
  %1015 = vmatpush2.msra.mxu0 0.0
  %1016 = vmatprep.subr.mxu0 0.0
  %1017 = vmatpush2.msra.mxu0 0.0
  %1018 = vmatprep.subr.mxu0 0.0
  %1019 = vmatpush2.msra.mxu0 0.0
  %1020 = vmatprep.mubr.f32.mxu0 0.0
  %1021 = vmatmul.mubr.f32.gmra.mxu0 %v802
  %v1022 = vpop.f32.mrf.mxu0
  %v1023 = vadd.f32 0.0, %v1022
  %v1024 = vpop.f32.mrf.mxu0
  %1025 = vdwg.mxu0
  %v1026 = vadd.f32 %v767, %v881
  %v1027 = vadd.f32 %v768, %v883
  %v1028 = vadd.f32 %v769, %v952
  %v1029 = vadd.f32 %v770, %v954
  %v1030 = vadd.f32 %v771, %v1023
  %v1031 = vld [vmem:[#allocation2] sm:$0xff]
  %v1032 = vld [vmem:[#allocation2 + $0x8] sm:$0xff]
  %v1033 = vld [vmem:[#allocation2 + $0x10] sm:$0xff]
  %s1034 = scalar_lea.vmem %s1, 32
  %v1035 = vld [vmem:[%s1034] sm:$0xff]
  %v1039 = vcombine.high %v1031, %v1031
  %v1040 = vcombine.high %v1032, %v1032
  %v1041 = vcombine.high %v1033, %v1033
  %1042 = vrot.lane.b32.xlu0 %v1031, 109
  %v1043 = vpop.permute.xlu0 %1042
  %1044 = vrot.lane.b32.xlu0 %v1039, 109
  %v1045 = vpop.permute.xlu0 %1044
  %1046 = vrot.lane.b32.xlu0 %v1032, 109
  %v1047 = vpop.permute.xlu0 %1046
  %1048 = vrot.lane.b32.xlu0 %v1040, 109
  %v1049 = vpop.permute.xlu0 %1048
  %1050 = vrot.lane.b32.xlu0 %v1033, 109
  %v1051 = vpop.permute.xlu0 %1050
  %1052 = vrot.lane.b32.xlu0 %v1041, 109
  %v1053 = vpop.permute.xlu0 %1052
  %vm1054 = vcmask 891904
  %v1055 = vsel %vm1054, %v1043, %v1045
  %v1056 = vsel %vm1054, %v1045, %v1047
  %v1057 = vsel %vm1054, %v1047, %v1049
  %v1058 = vsel %vm1054, %v1049, %v1051
  %v1059 = vsel %vm1054, %v1051, %v1053
  %v1061 = vsel %vm56, %v1035, 0
  %v1063 = vsel %vm60, %v1055, 0
  %v1065 = vsel %vm60, %v1056, 0
  %v1067 = vsel %vm60, %v1057, 0
  %v1069 = vsel %vm60, %v1058, 0
  %v1071 = vsel %vm60, %v1059, 0
  %1073 = vmatprep.subr.mxu0 0.0
  %1074 = vmatpush1.msra.mxu0 0.0
  %1075 = vmatprep.subr.mxu0 0.0
  %1076 = vmatpush1.msra.mxu0 0.0
  %1077 = vmatprep.subr.mxu0 0.0
  %1078 = vmatpush1.msra.mxu0 0.0
  %1079 = vmatprep.subr.mxu0 0.0
  %1080 = vmatpush1.msra.mxu0 0.0
  %1081 = vmatprep.subr.mxu0 0.0
  %1082 = vmatpush1.msra.mxu0 0.0
  %1083 = vmatprep.subr.mxu0 0.0
  %1084 = vmatpush1.msra.mxu0 0.0
  %1085 = vmatprep.subr.mxu0 0.0
  %1086 = vmatpush1.msra.mxu0 0.0
  %1087 = vmatprep.subr.mxu0 0.0
  %1088 = vmatpush1.msra.mxu0 0.0
  %1089 = vmatprep.subr.mxu0 0.0
  %1090 = vmatpush1.msra.mxu0 0.0
  %1091 = vmatprep.subr.mxu0 0.0
  %1092 = vmatpush1.msra.mxu0 0.0
  %1093 = vmatprep.subr.mxu0 0.0
  %1094 = vmatpush1.msra.mxu0 0.0
  %1095 = vmatprep.subr.mxu0 0.0
  %1096 = vmatpush1.msra.mxu0 0.0
  %1097 = vmatprep.subr.mxu0 0.0
  %1098 = vmatpush1.msra.mxu0 0.0
  %1099 = vmatprep.subr.mxu0 0.0
  %1100 = vmatpush1.msra.mxu0 0.0
  %1101 = vmatprep.subr.mxu0 0.0
  %1102 = vmatpush1.msra.mxu0 0.0
  %1103 = vmatprep.subr.mxu0 %v1065
  %1104 = vmatpush1.msra.mxu0 %v1063
  %1105 = vmatprep.subr.mxu0 0.0
  %1106 = vmatpush2.msra.mxu0 0.0
  %1107 = vmatprep.subr.mxu0 0.0
  %1108 = vmatpush2.msra.mxu0 0.0
  %1109 = vmatprep.subr.mxu0 0.0
  %1110 = vmatpush2.msra.mxu0 0.0
  %1111 = vmatprep.subr.mxu0 0.0
  %1112 = vmatpush2.msra.mxu0 0.0
  %1113 = vmatprep.subr.mxu0 0.0
  %1114 = vmatpush2.msra.mxu0 0.0
  %1115 = vmatprep.subr.mxu0 0.0
  %1116 = vmatpush2.msra.mxu0 0.0
  %1117 = vmatprep.subr.mxu0 0.0
  %1118 = vmatpush2.msra.mxu0 0.0
  %1119 = vmatprep.subr.mxu0 0.0
  %1120 = vmatpush2.msra.mxu0 0.0
  %1121 = vmatprep.subr.mxu0 0.0
  %1122 = vmatpush2.msra.mxu0 0.0
  %1123 = vmatprep.subr.mxu0 0.0
  %1124 = vmatpush2.msra.mxu0 0.0
  %1125 = vmatprep.subr.mxu0 0.0
  %1126 = vmatpush2.msra.mxu0 0.0
  %1127 = vmatprep.subr.mxu0 0.0
  %1128 = vmatpush2.msra.mxu0 0.0
  %1129 = vmatprep.subr.mxu0 0.0
  %1130 = vmatpush2.msra.mxu0 0.0
  %1131 = vmatprep.subr.mxu0 0.0
  %1132 = vmatpush2.msra.mxu0 0.0
  %1133 = vmatprep.subr.mxu0 0.0
  %1134 = vmatpush2.msra.mxu0 0.0
  %1135 = vmatprep.subr.mxu0 0.0
  %1136 = vmatpush2.msra.mxu0 0.0
  %1137 = vmatprep.mubr.f32.mxu0 0.0
  %1138 = vmatmul.mubr.f32.gmra.mxu0 %v1061
  %v1139 = vpop.f32.mrf.mxu0
  %v1140 = vadd.f32 0.0, %v1139
  %v1141 = vpop.f32.mrf.mxu0
  %v1142 = vadd.f32 0.0, %v1141
  %1143 = vdwg.mxu0
  %1144 = vmatprep.subr.mxu0 0.0
  %1145 = vmatpush1.msra.mxu0 0.0
  %1146 = vmatprep.subr.mxu0 0.0
  %1147 = vmatpush1.msra.mxu0 0.0
  %1148 = vmatprep.subr.mxu0 0.0
  %1149 = vmatpush1.msra.mxu0 0.0
  %1150 = vmatprep.subr.mxu0 0.0
  %1151 = vmatpush1.msra.mxu0 0.0
  %1152 = vmatprep.subr.mxu0 0.0
  %1153 = vmatpush1.msra.mxu0 0.0
  %1154 = vmatprep.subr.mxu0 0.0
  %1155 = vmatpush1.msra.mxu0 0.0
  %1156 = vmatprep.subr.mxu0 0.0
  %1157 = vmatpush1.msra.mxu0 0.0
  %1158 = vmatprep.subr.mxu0 0.0
  %1159 = vmatpush1.msra.mxu0 0.0
  %1160 = vmatprep.subr.mxu0 0.0
  %1161 = vmatpush1.msra.mxu0 0.0
  %1162 = vmatprep.subr.mxu0 0.0
  %1163 = vmatpush1.msra.mxu0 0.0
  %1164 = vmatprep.subr.mxu0 0.0
  %1165 = vmatpush1.msra.mxu0 0.0
  %1166 = vmatprep.subr.mxu0 0.0
  %1167 = vmatpush1.msra.mxu0 0.0
  %1168 = vmatprep.subr.mxu0 0.0
  %1169 = vmatpush1.msra.mxu0 0.0
  %1170 = vmatprep.subr.mxu0 0.0
  %1171 = vmatpush1.msra.mxu0 0.0
  %1172 = vmatprep.subr.mxu0 0.0
  %1173 = vmatpush1.msra.mxu0 0.0
  %1174 = vmatprep.subr.mxu0 %v1069
  %1175 = vmatpush1.msra.mxu0 %v1067
  %1176 = vmatprep.subr.mxu0 0.0
  %1177 = vmatpush2.msra.mxu0 0.0
  %1178 = vmatprep.subr.mxu0 0.0
  %1179 = vmatpush2.msra.mxu0 0.0
  %1180 = vmatprep.subr.mxu0 0.0
  %1181 = vmatpush2.msra.mxu0 0.0
  %1182 = vmatprep.subr.mxu0 0.0
  %1183 = vmatpush2.msra.mxu0 0.0
  %1184 = vmatprep.subr.mxu0 0.0
  %1185 = vmatpush2.msra.mxu0 0.0
  %1186 = vmatprep.subr.mxu0 0.0
  %1187 = vmatpush2.msra.mxu0 0.0
  %1188 = vmatprep.subr.mxu0 0.0
  %1189 = vmatpush2.msra.mxu0 0.0
  %1190 = vmatprep.subr.mxu0 0.0
  %1191 = vmatpush2.msra.mxu0 0.0
  %1192 = vmatprep.subr.mxu0 0.0
  %1193 = vmatpush2.msra.mxu0 0.0
  %1194 = vmatprep.subr.mxu0 0.0
  %1195 = vmatpush2.msra.mxu0 0.0
  %1196 = vmatprep.subr.mxu0 0.0
  %1197 = vmatpush2.msra.mxu0 0.0
  %1198 = vmatprep.subr.mxu0 0.0
  %1199 = vmatpush2.msra.mxu0 0.0
  %1200 = vmatprep.subr.mxu0 0.0
  %1201 = vmatpush2.msra.mxu0 0.0
  %1202 = vmatprep.subr.mxu0 0.0
  %1203 = vmatpush2.msra.mxu0 0.0
  %1204 = vmatprep.subr.mxu0 0.0
  %1205 = vmatpush2.msra.mxu0 0.0
  %1206 = vmatprep.subr.mxu0 0.0
  %1207 = vmatpush2.msra.mxu0 0.0
  %1208 = vmatprep.mubr.f32.mxu0 0.0
  %1209 = vmatmul.mubr.f32.gmra.mxu0 %v1061
  %v1210 = vpop.f32.mrf.mxu0
  %v1211 = vadd.f32 0.0, %v1210
  %v1212 = vpop.f32.mrf.mxu0
  %v1213 = vadd.f32 0.0, %v1212
  %1214 = vdwg.mxu0
  %1215 = vmatprep.subr.mxu0 0.0
  %1216 = vmatpush1.msra.mxu0 0.0
  %1217 = vmatprep.subr.mxu0 0.0
  %1218 = vmatpush1.msra.mxu0 0.0
  %1219 = vmatprep.subr.mxu0 0.0
  %1220 = vmatpush1.msra.mxu0 0.0
  %1221 = vmatprep.subr.mxu0 0.0
  %1222 = vmatpush1.msra.mxu0 0.0
  %1223 = vmatprep.subr.mxu0 0.0
  %1224 = vmatpush1.msra.mxu0 0.0
  %1225 = vmatprep.subr.mxu0 0.0
  %1226 = vmatpush1.msra.mxu0 0.0
  %1227 = vmatprep.subr.mxu0 0.0
  %1228 = vmatpush1.msra.mxu0 0.0
  %1229 = vmatprep.subr.mxu0 0.0
  %1230 = vmatpush1.msra.mxu0 0.0
  %1231 = vmatprep.subr.mxu0 0.0
  %1232 = vmatpush1.msra.mxu0 0.0
  %1233 = vmatprep.subr.mxu0 0.0
  %1234 = vmatpush1.msra.mxu0 0.0
  %1235 = vmatprep.subr.mxu0 0.0
  %1236 = vmatpush1.msra.mxu0 0.0
  %1237 = vmatprep.subr.mxu0 0.0
  %1238 = vmatpush1.msra.mxu0 0.0
  %1239 = vmatprep.subr.mxu0 0.0
  %1240 = vmatpush1.msra.mxu0 0.0
  %1241 = vmatprep.subr.mxu0 0.0
  %1242 = vmatpush1.msra.mxu0 0.0
  %1243 = vmatprep.subr.mxu0 0.0
  %1244 = vmatpush1.msra.mxu0 0.0
  %1245 = vmatprep.subr.mxu0 0.0
  %1246 = vmatpush1.msra.mxu0 %v1071
  %1247 = vmatprep.subr.mxu0 0.0
  %1248 = vmatpush2.msra.mxu0 0.0
  %1249 = vmatprep.subr.mxu0 0.0
  %1250 = vmatpush2.msra.mxu0 0.0
  %1251 = vmatprep.subr.mxu0 0.0
  %1252 = vmatpush2.msra.mxu0 0.0
  %1253 = vmatprep.subr.mxu0 0.0
  %1254 = vmatpush2.msra.mxu0 0.0
  %1255 = vmatprep.subr.mxu0 0.0
  %1256 = vmatpush2.msra.mxu0 0.0
  %1257 = vmatprep.subr.mxu0 0.0
  %1258 = vmatpush2.msra.mxu0 0.0
  %1259 = vmatprep.subr.mxu0 0.0
  %1260 = vmatpush2.msra.mxu0 0.0
  %1261 = vmatprep.subr.mxu0 0.0
  %1262 = vmatpush2.msra.mxu0 0.0
  %1263 = vmatprep.subr.mxu0 0.0
  %1264 = vmatpush2.msra.mxu0 0.0
  %1265 = vmatprep.subr.mxu0 0.0
  %1266 = vmatpush2.msra.mxu0 0.0
  %1267 = vmatprep.subr.mxu0 0.0
  %1268 = vmatpush2.msra.mxu0 0.0
  %1269 = vmatprep.subr.mxu0 0.0
  %1270 = vmatpush2.msra.mxu0 0.0
  %1271 = vmatprep.subr.mxu0 0.0
  %1272 = vmatpush2.msra.mxu0 0.0
  %1273 = vmatprep.subr.mxu0 0.0
  %1274 = vmatpush2.msra.mxu0 0.0
  %1275 = vmatprep.subr.mxu0 0.0
  %1276 = vmatpush2.msra.mxu0 0.0
  %1277 = vmatprep.subr.mxu0 0.0
  %1278 = vmatpush2.msra.mxu0 0.0
  %1279 = vmatprep.mubr.f32.mxu0 0.0
  %1280 = vmatmul.mubr.f32.gmra.mxu0 %v1061
  %v1281 = vpop.f32.mrf.mxu0
  %v1282 = vadd.f32 0.0, %v1281
  %v1283 = vpop.f32.mrf.mxu0
  %1284 = vdwg.mxu0
  %v1285 = vadd.f32 %v1026, %v1140
  %v1286 = vadd.f32 %v1027, %v1142
  %v1287 = vadd.f32 %v1028, %v1211
  %v1288 = vadd.f32 %v1029, %v1213
  %v1289 = vadd.f32 %v1030, %v1282
  %v1290 = vld [vmem:[#allocation2] sm:$0xff]
  %v1291 = vld [vmem:[#allocation2 + $0x8] sm:$0xff]
  %v1292 = vld [vmem:[#allocation2 + $0x10] sm:$0xff]
  %s1293 = scalar_lea.vmem %s1, 40
  %v1294 = vld [vmem:[%s1293] sm:$0xff]
  %v1298 = vcombine.high %v1290, %v1290
  %v1299 = vcombine.high %v1291, %v1291
  %v1300 = vcombine.high %v1292, %v1292
  %1301 = vrot.lane.b32.xlu0 %v1290, 108
  %v1302 = vpop.permute.xlu0 %1301
  %1303 = vrot.lane.b32.xlu0 %v1298, 108
  %v1304 = vpop.permute.xlu0 %1303
  %1305 = vrot.lane.b32.xlu0 %v1291, 108
  %v1306 = vpop.permute.xlu0 %1305
  %1307 = vrot.lane.b32.xlu0 %v1299, 108
  %v1308 = vpop.permute.xlu0 %1307
  %1309 = vrot.lane.b32.xlu0 %v1292, 108
  %v1310 = vpop.permute.xlu0 %1309
  %1311 = vrot.lane.b32.xlu0 %v1300, 108
  %v1312 = vpop.permute.xlu0 %1311
  %vm1313 = vcmask 883712
  %v1314 = vsel %vm1313, %v1302, %v1304
  %v1315 = vsel %vm1313, %v1304, %v1306
  %v1316 = vsel %vm1313, %v1306, %v1308
  %v1317 = vsel %vm1313, %v1308, %v1310
  %v1318 = vsel %vm1313, %v1310, %v1312
  %v1320 = vsel %vm56, %v1294, 0
  %v1322 = vsel %vm60, %v1314, 0
  %v1324 = vsel %vm60, %v1315, 0
  %v1326 = vsel %vm60, %v1316, 0
  %v1328 = vsel %vm60, %v1317, 0
  %v1330 = vsel %vm60, %v1318, 0
  %1332 = vmatprep.subr.mxu0 0.0
  %1333 = vmatpush1.msra.mxu0 0.0
  %1334 = vmatprep.subr.mxu0 0.0
  %1335 = vmatpush1.msra.mxu0 0.0
  %1336 = vmatprep.subr.mxu0 0.0
  %1337 = vmatpush1.msra.mxu0 0.0
  %1338 = vmatprep.subr.mxu0 0.0
  %1339 = vmatpush1.msra.mxu0 0.0
  %1340 = vmatprep.subr.mxu0 0.0
  %1341 = vmatpush1.msra.mxu0 0.0
  %1342 = vmatprep.subr.mxu0 0.0
  %1343 = vmatpush1.msra.mxu0 0.0
  %1344 = vmatprep.subr.mxu0 0.0
  %1345 = vmatpush1.msra.mxu0 0.0
  %1346 = vmatprep.subr.mxu0 0.0
  %1347 = vmatpush1.msra.mxu0 0.0
  %1348 = vmatprep.subr.mxu0 0.0
  %1349 = vmatpush1.msra.mxu0 0.0
  %1350 = vmatprep.subr.mxu0 0.0
  %1351 = vmatpush1.msra.mxu0 0.0
  %1352 = vmatprep.subr.mxu0 0.0
  %1353 = vmatpush1.msra.mxu0 0.0
  %1354 = vmatprep.subr.mxu0 0.0
  %1355 = vmatpush1.msra.mxu0 0.0
  %1356 = vmatprep.subr.mxu0 0.0
  %1357 = vmatpush1.msra.mxu0 0.0
  %1358 = vmatprep.subr.mxu0 0.0
  %1359 = vmatpush1.msra.mxu0 0.0
  %1360 = vmatprep.subr.mxu0 0.0
  %1361 = vmatpush1.msra.mxu0 0.0
  %1362 = vmatprep.subr.mxu0 %v1324
  %1363 = vmatpush1.msra.mxu0 %v1322
  %1364 = vmatprep.subr.mxu0 0.0
  %1365 = vmatpush2.msra.mxu0 0.0
  %1366 = vmatprep.subr.mxu0 0.0
  %1367 = vmatpush2.msra.mxu0 0.0
  %1368 = vmatprep.subr.mxu0 0.0
  %1369 = vmatpush2.msra.mxu0 0.0
  %1370 = vmatprep.subr.mxu0 0.0
  %1371 = vmatpush2.msra.mxu0 0.0
  %1372 = vmatprep.subr.mxu0 0.0
  %1373 = vmatpush2.msra.mxu0 0.0
  %1374 = vmatprep.subr.mxu0 0.0
  %1375 = vmatpush2.msra.mxu0 0.0
  %1376 = vmatprep.subr.mxu0 0.0
  %1377 = vmatpush2.msra.mxu0 0.0
  %1378 = vmatprep.subr.mxu0 0.0
  %1379 = vmatpush2.msra.mxu0 0.0
  %1380 = vmatprep.subr.mxu0 0.0
  %1381 = vmatpush2.msra.mxu0 0.0
  %1382 = vmatprep.subr.mxu0 0.0
  %1383 = vmatpush2.msra.mxu0 0.0
  %1384 = vmatprep.subr.mxu0 0.0
  %1385 = vmatpush2.msra.mxu0 0.0
  %1386 = vmatprep.subr.mxu0 0.0
  %1387 = vmatpush2.msra.mxu0 0.0
  %1388 = vmatprep.subr.mxu0 0.0
  %1389 = vmatpush2.msra.mxu0 0.0
  %1390 = vmatprep.subr.mxu0 0.0
  %1391 = vmatpush2.msra.mxu0 0.0
  %1392 = vmatprep.subr.mxu0 0.0
  %1393 = vmatpush2.msra.mxu0 0.0
  %1394 = vmatprep.subr.mxu0 0.0
  %1395 = vmatpush2.msra.mxu0 0.0
  %1396 = vmatprep.mubr.f32.mxu0 0.0
  %1397 = vmatmul.mubr.f32.gmra.mxu0 %v1320
  %v1398 = vpop.f32.mrf.mxu0
  %v1399 = vadd.f32 0.0, %v1398
  %v1400 = vpop.f32.mrf.mxu0
  %v1401 = vadd.f32 0.0, %v1400
  %1402 = vdwg.mxu0
  %1403 = vmatprep.subr.mxu0 0.0
  %1404 = vmatpush1.msra.mxu0 0.0
  %1405 = vmatprep.subr.mxu0 0.0
  %1406 = vmatpush1.msra.mxu0 0.0
  %1407 = vmatprep.subr.mxu0 0.0
  %1408 = vmatpush1.msra.mxu0 0.0
  %1409 = vmatprep.subr.mxu0 0.0
  %1410 = vmatpush1.msra.mxu0 0.0
  %1411 = vmatprep.subr.mxu0 0.0
  %1412 = vmatpush1.msra.mxu0 0.0
  %1413 = vmatprep.subr.mxu0 0.0
  %1414 = vmatpush1.msra.mxu0 0.0
  %1415 = vmatprep.subr.mxu0 0.0
  %1416 = vmatpush1.msra.mxu0 0.0
  %1417 = vmatprep.subr.mxu0 0.0
  %1418 = vmatpush1.msra.mxu0 0.0
  %1419 = vmatprep.subr.mxu0 0.0
  %1420 = vmatpush1.msra.mxu0 0.0
  %1421 = vmatprep.subr.mxu0 0.0
  %1422 = vmatpush1.msra.mxu0 0.0
  %1423 = vmatprep.subr.mxu0 0.0
  %1424 = vmatpush1.msra.mxu0 0.0
  %1425 = vmatprep.subr.mxu0 0.0
  %1426 = vmatpush1.msra.mxu0 0.0
  %1427 = vmatprep.subr.mxu0 0.0
  %1428 = vmatpush1.msra.mxu0 0.0
  %1429 = vmatprep.subr.mxu0 0.0
  %1430 = vmatpush1.msra.mxu0 0.0
  %1431 = vmatprep.subr.mxu0 0.0
  %1432 = vmatpush1.msra.mxu0 0.0
  %1433 = vmatprep.subr.mxu0 %v1328
  %1434 = vmatpush1.msra.mxu0 %v1326
  %1435 = vmatprep.subr.mxu0 0.0
  %1436 = vmatpush2.msra.mxu0 0.0
  %1437 = vmatprep.subr.mxu0 0.0
  %1438 = vmatpush2.msra.mxu0 0.0
  %1439 = vmatprep.subr.mxu0 0.0
  %1440 = vmatpush2.msra.mxu0 0.0
  %1441 = vmatprep.subr.mxu0 0.0
  %1442 = vmatpush2.msra.mxu0 0.0
  %1443 = vmatprep.subr.mxu0 0.0
  %1444 = vmatpush2.msra.mxu0 0.0
  %1445 = vmatprep.subr.mxu0 0.0
  %1446 = vmatpush2.msra.mxu0 0.0
  %1447 = vmatprep.subr.mxu0 0.0
  %1448 = vmatpush2.msra.mxu0 0.0
  %1449 = vmatprep.subr.mxu0 0.0
  %1450 = vmatpush2.msra.mxu0 0.0
  %1451 = vmatprep.subr.mxu0 0.0
  %1452 = vmatpush2.msra.mxu0 0.0
  %1453 = vmatprep.subr.mxu0 0.0
  %1454 = vmatpush2.msra.mxu0 0.0
  %1455 = vmatprep.subr.mxu0 0.0
  %1456 = vmatpush2.msra.mxu0 0.0
  %1457 = vmatprep.subr.mxu0 0.0
  %1458 = vmatpush2.msra.mxu0 0.0
  %1459 = vmatprep.subr.mxu0 0.0
  %1460 = vmatpush2.msra.mxu0 0.0
  %1461 = vmatprep.subr.mxu0 0.0
  %1462 = vmatpush2.msra.mxu0 0.0
  %1463 = vmatprep.subr.mxu0 0.0
  %1464 = vmatpush2.msra.mxu0 0.0
  %1465 = vmatprep.subr.mxu0 0.0
  %1466 = vmatpush2.msra.mxu0 0.0
  %1467 = vmatprep.mubr.f32.mxu0 0.0
  %1468 = vmatmul.mubr.f32.gmra.mxu0 %v1320
  %v1469 = vpop.f32.mrf.mxu0
  %v1470 = vadd.f32 0.0, %v1469
  %v1471 = vpop.f32.mrf.mxu0
  %v1472 = vadd.f32 0.0, %v1471
  %1473 = vdwg.mxu0
  %1474 = vmatprep.subr.mxu0 0.0
  %1475 = vmatpush1.msra.mxu0 0.0
  %1476 = vmatprep.subr.mxu0 0.0
  %1477 = vmatpush1.msra.mxu0 0.0
  %1478 = vmatprep.subr.mxu0 0.0
  %1479 = vmatpush1.msra.mxu0 0.0
  %1480 = vmatprep.subr.mxu0 0.0
  %1481 = vmatpush1.msra.mxu0 0.0
  %1482 = vmatprep.subr.mxu0 0.0
  %1483 = vmatpush1.msra.mxu0 0.0
  %1484 = vmatprep.subr.mxu0 0.0
  %1485 = vmatpush1.msra.mxu0 0.0
  %1486 = vmatprep.subr.mxu0 0.0
  %1487 = vmatpush1.msra.mxu0 0.0
  %1488 = vmatprep.subr.mxu0 0.0
  %1489 = vmatpush1.msra.mxu0 0.0
  %1490 = vmatprep.subr.mxu0 0.0
  %1491 = vmatpush1.msra.mxu0 0.0
  %1492 = vmatprep.subr.mxu0 0.0
  %1493 = vmatpush1.msra.mxu0 0.0
  %1494 = vmatprep.subr.mxu0 0.0
  %1495 = vmatpush1.msra.mxu0 0.0
  %1496 = vmatprep.subr.mxu0 0.0
  %1497 = vmatpush1.msra.mxu0 0.0
  %1498 = vmatprep.subr.mxu0 0.0
  %1499 = vmatpush1.msra.mxu0 0.0
  %1500 = vmatprep.subr.mxu0 0.0
  %1501 = vmatpush1.msra.mxu0 0.0
  %1502 = vmatprep.subr.mxu0 0.0
  %1503 = vmatpush1.msra.mxu0 0.0
  %1504 = vmatprep.subr.mxu0 0.0
  %1505 = vmatpush1.msra.mxu0 %v1330
  %1506 = vmatprep.subr.mxu0 0.0
  %1507 = vmatpush2.msra.mxu0 0.0
  %1508 = vmatprep.subr.mxu0 0.0
  %1509 = vmatpush2.msra.mxu0 0.0
  %1510 = vmatprep.subr.mxu0 0.0
  %1511 = vmatpush2.msra.mxu0 0.0
  %1512 = vmatprep.subr.mxu0 0.0
  %1513 = vmatpush2.msra.mxu0 0.0
  %1514 = vmatprep.subr.mxu0 0.0
  %1515 = vmatpush2.msra.mxu0 0.0
  %1516 = vmatprep.subr.mxu0 0.0
  %1517 = vmatpush2.msra.mxu0 0.0
  %1518 = vmatprep.subr.mxu0 0.0
  %1519 = vmatpush2.msra.mxu0 0.0
  %1520 = vmatprep.subr.mxu0 0.0
  %1521 = vmatpush2.msra.mxu0 0.0
  %1522 = vmatprep.subr.mxu0 0.0
  %1523 = vmatpush2.msra.mxu0 0.0
  %1524 = vmatprep.subr.mxu0 0.0
  %1525 = vmatpush2.msra.mxu0 0.0
  %1526 = vmatprep.subr.mxu0 0.0
  %1527 = vmatpush2.msra.mxu0 0.0
  %1528 = vmatprep.subr.mxu0 0.0
  %1529 = vmatpush2.msra.mxu0 0.0
  %1530 = vmatprep.subr.mxu0 0.0
  %1531 = vmatpush2.msra.mxu0 0.0
  %1532 = vmatprep.subr.mxu0 0.0
  %1533 = vmatpush2.msra.mxu0 0.0
  %1534 = vmatprep.subr.mxu0 0.0
  %1535 = vmatpush2.msra.mxu0 0.0
  %1536 = vmatprep.subr.mxu0 0.0
  %1537 = vmatpush2.msra.mxu0 0.0
  %1538 = vmatprep.mubr.f32.mxu0 0.0
  %1539 = vmatmul.mubr.f32.gmra.mxu0 %v1320
  %v1540 = vpop.f32.mrf.mxu0
  %v1541 = vadd.f32 0.0, %v1540
  %v1542 = vpop.f32.mrf.mxu0
  %1543 = vdwg.mxu0
  %v1544 = vadd.f32 %v1285, %v1399
  %v1545 = vadd.f32 %v1286, %v1401
  %v1546 = vadd.f32 %v1287, %v1470
  %v1547 = vadd.f32 %v1288, %v1472
  %v1548 = vadd.f32 %v1289, %v1541
  %v1549 = vld [vmem:[#allocation2] sm:$0xff]
  %v1550 = vld [vmem:[#allocation2 + $0x8] sm:$0xff]
  %v1551 = vld [vmem:[#allocation2 + $0x10] sm:$0xff]
  %s1552 = scalar_lea.vmem %s1, 48
  %v1553 = vld [vmem:[%s1552] sm:$0xff]
  %v1557 = vcombine.high %v1549, %v1549
  %v1558 = vcombine.high %v1550, %v1550
  %v1559 = vcombine.high %v1551, %v1551
  %1560 = vrot.lane.b32.xlu0 %v1549, 92
  %v1561 = vpop.permute.xlu0 %1560
  %1562 = vrot.lane.b32.xlu0 %v1557, 92
  %v1563 = vpop.permute.xlu0 %1562
  %1564 = vrot.lane.b32.xlu0 %v1550, 92
  %v1565 = vpop.permute.xlu0 %1564
  %1566 = vrot.lane.b32.xlu0 %v1558, 92
  %v1567 = vpop.permute.xlu0 %1566
  %1568 = vrot.lane.b32.xlu0 %v1551, 92
  %v1569 = vpop.permute.xlu0 %1568
  %1570 = vrot.lane.b32.xlu0 %v1559, 92
  %v1571 = vpop.permute.xlu0 %1570
  %vm1572 = vcmask 752640
  %v1573 = vsel %vm1572, %v1561, %v1563
  %v1574 = vsel %vm1572, %v1563, %v1565
  %v1575 = vsel %vm1572, %v1565, %v1567
  %v1576 = vsel %vm1572, %v1567, %v1569
  %v1577 = vsel %vm1572, %v1569, %v1571
  %v1579 = vsel %vm56, %v1553, 0
  %v1581 = vsel %vm60, %v1573, 0
  %v1583 = vsel %vm60, %v1574, 0
  %v1585 = vsel %vm60, %v1575, 0
  %v1587 = vsel %vm60, %v1576, 0
  %v1589 = vsel %vm60, %v1577, 0
  %1591 = vmatprep.subr.mxu0 0.0
  %1592 = vmatpush1.msra.mxu0 0.0
  %1593 = vmatprep.subr.mxu0 0.0
  %1594 = vmatpush1.msra.mxu0 0.0
  %1595 = vmatprep.subr.mxu0 0.0
  %1596 = vmatpush1.msra.mxu0 0.0
  %1597 = vmatprep.subr.mxu0 0.0
  %1598 = vmatpush1.msra.mxu0 0.0
  %1599 = vmatprep.subr.mxu0 0.0
  %1600 = vmatpush1.msra.mxu0 0.0
  %1601 = vmatprep.subr.mxu0 0.0
  %1602 = vmatpush1.msra.mxu0 0.0
  %1603 = vmatprep.subr.mxu0 0.0
  %1604 = vmatpush1.msra.mxu0 0.0
  %1605 = vmatprep.subr.mxu0 0.0
  %1606 = vmatpush1.msra.mxu0 0.0
  %1607 = vmatprep.subr.mxu0 0.0
  %1608 = vmatpush1.msra.mxu0 0.0
  %1609 = vmatprep.subr.mxu0 0.0
  %1610 = vmatpush1.msra.mxu0 0.0
  %1611 = vmatprep.subr.mxu0 0.0
  %1612 = vmatpush1.msra.mxu0 0.0
  %1613 = vmatprep.subr.mxu0 0.0
  %1614 = vmatpush1.msra.mxu0 0.0
  %1615 = vmatprep.subr.mxu0 0.0
  %1616 = vmatpush1.msra.mxu0 0.0
  %1617 = vmatprep.subr.mxu0 0.0
  %1618 = vmatpush1.msra.mxu0 0.0
  %1619 = vmatprep.subr.mxu0 0.0
  %1620 = vmatpush1.msra.mxu0 0.0
  %1621 = vmatprep.subr.mxu0 %v1583
  %1622 = vmatpush1.msra.mxu0 %v1581
  %1623 = vmatprep.subr.mxu0 0.0
  %1624 = vmatpush2.msra.mxu0 0.0
  %1625 = vmatprep.subr.mxu0 0.0
  %1626 = vmatpush2.msra.mxu0 0.0
  %1627 = vmatprep.subr.mxu0 0.0
  %1628 = vmatpush2.msra.mxu0 0.0
  %1629 = vmatprep.subr.mxu0 0.0
  %1630 = vmatpush2.msra.mxu0 0.0
  %1631 = vmatprep.subr.mxu0 0.0
  %1632 = vmatpush2.msra.mxu0 0.0
  %1633 = vmatprep.subr.mxu0 0.0
  %1634 = vmatpush2.msra.mxu0 0.0
  %1635 = vmatprep.subr.mxu0 0.0
  %1636 = vmatpush2.msra.mxu0 0.0
  %1637 = vmatprep.subr.mxu0 0.0
  %1638 = vmatpush2.msra.mxu0 0.0
  %1639 = vmatprep.subr.mxu0 0.0
  %1640 = vmatpush2.msra.mxu0 0.0
  %1641 = vmatprep.subr.mxu0 0.0
  %1642 = vmatpush2.msra.mxu0 0.0
  %1643 = vmatprep.subr.mxu0 0.0
  %1644 = vmatpush2.msra.mxu0 0.0
  %1645 = vmatprep.subr.mxu0 0.0
  %1646 = vmatpush2.msra.mxu0 0.0
  %1647 = vmatprep.subr.mxu0 0.0
  %1648 = vmatpush2.msra.mxu0 0.0
  %1649 = vmatprep.subr.mxu0 0.0
  %1650 = vmatpush2.msra.mxu0 0.0
  %1651 = vmatprep.subr.mxu0 0.0
  %1652 = vmatpush2.msra.mxu0 0.0
  %1653 = vmatprep.subr.mxu0 0.0
  %1654 = vmatpush2.msra.mxu0 0.0
  %1655 = vmatprep.mubr.f32.mxu0 0.0
  %1656 = vmatmul.mubr.f32.gmra.mxu0 %v1579
  %v1657 = vpop.f32.mrf.mxu0
  %v1658 = vadd.f32 0.0, %v1657
  %v1659 = vpop.f32.mrf.mxu0
  %v1660 = vadd.f32 0.0, %v1659
  %1661 = vdwg.mxu0
  %1662 = vmatprep.subr.mxu0 0.0
  %1663 = vmatpush1.msra.mxu0 0.0
  %1664 = vmatprep.subr.mxu0 0.0
  %1665 = vmatpush1.msra.mxu0 0.0
  %1666 = vmatprep.subr.mxu0 0.0
  %1667 = vmatpush1.msra.mxu0 0.0
  %1668 = vmatprep.subr.mxu0 0.0
  %1669 = vmatpush1.msra.mxu0 0.0
  %1670 = vmatprep.subr.mxu0 0.0
  %1671 = vmatpush1.msra.mxu0 0.0
  %1672 = vmatprep.subr.mxu0 0.0
  %1673 = vmatpush1.msra.mxu0 0.0
  %1674 = vmatprep.subr.mxu0 0.0
  %1675 = vmatpush1.msra.mxu0 0.0
  %1676 = vmatprep.subr.mxu0 0.0
  %1677 = vmatpush1.msra.mxu0 0.0
  %1678 = vmatprep.subr.mxu0 0.0
  %1679 = vmatpush1.msra.mxu0 0.0
  %1680 = vmatprep.subr.mxu0 0.0
  %1681 = vmatpush1.msra.mxu0 0.0
  %1682 = vmatprep.subr.mxu0 0.0
  %1683 = vmatpush1.msra.mxu0 0.0
  %1684 = vmatprep.subr.mxu0 0.0
  %1685 = vmatpush1.msra.mxu0 0.0
  %1686 = vmatprep.subr.mxu0 0.0
  %1687 = vmatpush1.msra.mxu0 0.0
  %1688 = vmatprep.subr.mxu0 0.0
  %1689 = vmatpush1.msra.mxu0 0.0
  %1690 = vmatprep.subr.mxu0 0.0
  %1691 = vmatpush1.msra.mxu0 0.0
  %1692 = vmatprep.subr.mxu0 %v1587
  %1693 = vmatpush1.msra.mxu0 %v1585
  %1694 = vmatprep.subr.mxu0 0.0
  %1695 = vmatpush2.msra.mxu0 0.0
  %1696 = vmatprep.subr.mxu0 0.0
  %1697 = vmatpush2.msra.mxu0 0.0
  %1698 = vmatprep.subr.mxu0 0.0
  %1699 = vmatpush2.msra.mxu0 0.0
  %1700 = vmatprep.subr.mxu0 0.0
  %1701 = vmatpush2.msra.mxu0 0.0
  %1702 = vmatprep.subr.mxu0 0.0
  %1703 = vmatpush2.msra.mxu0 0.0
  %1704 = vmatprep.subr.mxu0 0.0
  %1705 = vmatpush2.msra.mxu0 0.0
  %1706 = vmatprep.subr.mxu0 0.0
  %1707 = vmatpush2.msra.mxu0 0.0
  %1708 = vmatprep.subr.mxu0 0.0
  %1709 = vmatpush2.msra.mxu0 0.0
  %1710 = vmatprep.subr.mxu0 0.0
  %1711 = vmatpush2.msra.mxu0 0.0
  %1712 = vmatprep.subr.mxu0 0.0
  %1713 = vmatpush2.msra.mxu0 0.0
  %1714 = vmatprep.subr.mxu0 0.0
  %1715 = vmatpush2.msra.mxu0 0.0
  %1716 = vmatprep.subr.mxu0 0.0
  %1717 = vmatpush2.msra.mxu0 0.0
  %1718 = vmatprep.subr.mxu0 0.0
  %1719 = vmatpush2.msra.mxu0 0.0
  %1720 = vmatprep.subr.mxu0 0.0
  %1721 = vmatpush2.msra.mxu0 0.0
  %1722 = vmatprep.subr.mxu0 0.0
  %1723 = vmatpush2.msra.mxu0 0.0
  %1724 = vmatprep.subr.mxu0 0.0
  %1725 = vmatpush2.msra.mxu0 0.0
  %1726 = vmatprep.mubr.f32.mxu0 0.0
  %1727 = vmatmul.mubr.f32.gmra.mxu0 %v1579
  %v1728 = vpop.f32.mrf.mxu0
  %v1729 = vadd.f32 0.0, %v1728
  %v1730 = vpop.f32.mrf.mxu0
  %v1731 = vadd.f32 0.0, %v1730
  %1732 = vdwg.mxu0
  %1733 = vmatprep.subr.mxu0 0.0
  %1734 = vmatpush1.msra.mxu0 0.0
  %1735 = vmatprep.subr.mxu0 0.0
  %1736 = vmatpush1.msra.mxu0 0.0
  %1737 = vmatprep.subr.mxu0 0.0
  %1738 = vmatpush1.msra.mxu0 0.0
  %1739 = vmatprep.subr.mxu0 0.0
  %1740 = vmatpush1.msra.mxu0 0.0
  %1741 = vmatprep.subr.mxu0 0.0
  %1742 = vmatpush1.msra.mxu0 0.0
  %1743 = vmatprep.subr.mxu0 0.0
  %1744 = vmatpush1.msra.mxu0 0.0
  %1745 = vmatprep.subr.mxu0 0.0
  %1746 = vmatpush1.msra.mxu0 0.0
  %1747 = vmatprep.subr.mxu0 0.0
  %1748 = vmatpush1.msra.mxu0 0.0
  %1749 = vmatprep.subr.mxu0 0.0
  %1750 = vmatpush1.msra.mxu0 0.0
  %1751 = vmatprep.subr.mxu0 0.0
  %1752 = vmatpush1.msra.mxu0 0.0
  %1753 = vmatprep.subr.mxu0 0.0
  %1754 = vmatpush1.msra.mxu0 0.0
  %1755 = vmatprep.subr.mxu0 0.0
  %1756 = vmatpush1.msra.mxu0 0.0
  %1757 = vmatprep.subr.mxu0 0.0
  %1758 = vmatpush1.msra.mxu0 0.0
  %1759 = vmatprep.subr.mxu0 0.0
  %1760 = vmatpush1.msra.mxu0 0.0
  %1761 = vmatprep.subr.mxu0 0.0
  %1762 = vmatpush1.msra.mxu0 0.0
  %1763 = vmatprep.subr.mxu0 0.0
  %1764 = vmatpush1.msra.mxu0 %v1589
  %1765 = vmatprep.subr.mxu0 0.0
  %1766 = vmatpush2.msra.mxu0 0.0
  %1767 = vmatprep.subr.mxu0 0.0
  %1768 = vmatpush2.msra.mxu0 0.0
  %1769 = vmatprep.subr.mxu0 0.0
  %1770 = vmatpush2.msra.mxu0 0.0
  %1771 = vmatprep.subr.mxu0 0.0
  %1772 = vmatpush2.msra.mxu0 0.0
  %1773 = vmatprep.subr.mxu0 0.0
  %1774 = vmatpush2.msra.mxu0 0.0
  %1775 = vmatprep.subr.mxu0 0.0
  %1776 = vmatpush2.msra.mxu0 0.0
  %1777 = vmatprep.subr.mxu0 0.0
  %1778 = vmatpush2.msra.mxu0 0.0
  %1779 = vmatprep.subr.mxu0 0.0
  %1780 = vmatpush2.msra.mxu0 0.0
  %1781 = vmatprep.subr.mxu0 0.0
  %1782 = vmatpush2.msra.mxu0 0.0
  %1783 = vmatprep.subr.mxu0 0.0
  %1784 = vmatpush2.msra.mxu0 0.0
  %1785 = vmatprep.subr.mxu0 0.0
  %1786 = vmatpush2.msra.mxu0 0.0
  %1787 = vmatprep.subr.mxu0 0.0
  %1788 = vmatpush2.msra.mxu0 0.0
  %1789 = vmatprep.subr.mxu0 0.0
  %1790 = vmatpush2.msra.mxu0 0.0
  %1791 = vmatprep.subr.mxu0 0.0
  %1792 = vmatpush2.msra.mxu0 0.0
  %1793 = vmatprep.subr.mxu0 0.0
  %1794 = vmatpush2.msra.mxu0 0.0
  %1795 = vmatprep.subr.mxu0 0.0
  %1796 = vmatpush2.msra.mxu0 0.0
  %1797 = vmatprep.mubr.f32.mxu0 0.0
  %1798 = vmatmul.mubr.f32.gmra.mxu0 %v1579
  %v1799 = vpop.f32.mrf.mxu0
  %v1800 = vadd.f32 0.0, %v1799
  %v1801 = vpop.f32.mrf.mxu0
  %1802 = vdwg.mxu0
  %v1803 = vadd.f32 %v1544, %v1658
  %v1804 = vadd.f32 %v1545, %v1660
  %v1805 = vadd.f32 %v1546, %v1729
  %v1806 = vadd.f32 %v1547, %v1731
  %v1807 = vadd.f32 %v1548, %v1800
  %v1808 = vld [vmem:[#allocation2] sm:$0xff]
  %v1809 = vld [vmem:[#allocation2 + $0x8] sm:$0xff]
  %v1810 = vld [vmem:[#allocation2 + $0x10] sm:$0xff]
  %s1811 = scalar_lea.vmem %s1, 56
  %v1812 = vld [vmem:[%s1811] sm:$0xff]
  %v1816 = vcombine.high %v1808, %v1808
  %v1817 = vcombine.high %v1809, %v1809
  %v1818 = vcombine.high %v1810, %v1810
  %1819 = vrot.lane.b32.xlu0 %v1808, 91
  %v1820 = vpop.permute.xlu0 %1819
  %1821 = vrot.lane.b32.xlu0 %v1816, 91
  %v1822 = vpop.permute.xlu0 %1821
  %1823 = vrot.lane.b32.xlu0 %v1809, 91
  %v1824 = vpop.permute.xlu0 %1823
  %1825 = vrot.lane.b32.xlu0 %v1817, 91
  %v1826 = vpop.permute.xlu0 %1825
  %1827 = vrot.lane.b32.xlu0 %v1810, 91
  %v1828 = vpop.permute.xlu0 %1827
  %1829 = vrot.lane.b32.xlu0 %v1818, 91
  %v1830 = vpop.permute.xlu0 %1829
  %vm1831 = vcmask 744448
  %v1832 = vsel %vm1831, %v1820, %v1822
  %v1833 = vsel %vm1831, %v1822, %v1824
  %v1834 = vsel %vm1831, %v1824, %v1826
  %v1835 = vsel %vm1831, %v1826, %v1828
  %v1836 = vsel %vm1831, %v1828, %v1830
  %v1838 = vsel %vm56, %v1812, 0
  %v1840 = vsel %vm60, %v1832, 0
  %v1842 = vsel %vm60, %v1833, 0
  %v1844 = vsel %vm60, %v1834, 0
  %v1846 = vsel %vm60, %v1835, 0
  %v1848 = vsel %vm60, %v1836, 0
  %1850 = vmatprep.subr.mxu0 0.0
  %1851 = vmatpush1.msra.mxu0 0.0
  %1852 = vmatprep.subr.mxu0 0.0
  %1853 = vmatpush1.msra.mxu0 0.0
  %1854 = vmatprep.subr.mxu0 0.0
  %1855 = vmatpush1.msra.mxu0 0.0
  %1856 = vmatprep.subr.mxu0 0.0
  %1857 = vmatpush1.msra.mxu0 0.0
  %1858 = vmatprep.subr.mxu0 0.0
  %1859 = vmatpush1.msra.mxu0 0.0
  %1860 = vmatprep.subr.mxu0 0.0
  %1861 = vmatpush1.msra.mxu0 0.0
  %1862 = vmatprep.subr.mxu0 0.0
  %1863 = vmatpush1.msra.mxu0 0.0
  %1864 = vmatprep.subr.mxu0 0.0
  %1865 = vmatpush1.msra.mxu0 0.0
  %1866 = vmatprep.subr.mxu0 0.0
  %1867 = vmatpush1.msra.mxu0 0.0
  %1868 = vmatprep.subr.mxu0 0.0
  %1869 = vmatpush1.msra.mxu0 0.0
  %1870 = vmatprep.subr.mxu0 0.0
  %1871 = vmatpush1.msra.mxu0 0.0
  %1872 = vmatprep.subr.mxu0 0.0
  %1873 = vmatpush1.msra.mxu0 0.0
  %1874 = vmatprep.subr.mxu0 0.0
  %1875 = vmatpush1.msra.mxu0 0.0
  %1876 = vmatprep.subr.mxu0 0.0
  %1877 = vmatpush1.msra.mxu0 0.0
  %1878 = vmatprep.subr.mxu0 0.0
  %1879 = vmatpush1.msra.mxu0 0.0
  %1880 = vmatprep.subr.mxu0 %v1842
  %1881 = vmatpush1.msra.mxu0 %v1840
  %1882 = vmatprep.subr.mxu0 0.0
  %1883 = vmatpush2.msra.mxu0 0.0
  %1884 = vmatprep.subr.mxu0 0.0
  %1885 = vmatpush2.msra.mxu0 0.0
  %1886 = vmatprep.subr.mxu0 0.0
  %1887 = vmatpush2.msra.mxu0 0.0
  %1888 = vmatprep.subr.mxu0 0.0
  %1889 = vmatpush2.msra.mxu0 0.0
  %1890 = vmatprep.subr.mxu0 0.0
  %1891 = vmatpush2.msra.mxu0 0.0
  %1892 = vmatprep.subr.mxu0 0.0
  %1893 = vmatpush2.msra.mxu0 0.0
  %1894 = vmatprep.subr.mxu0 0.0
  %1895 = vmatpush2.msra.mxu0 0.0
  %1896 = vmatprep.subr.mxu0 0.0
  %1897 = vmatpush2.msra.mxu0 0.0
  %1898 = vmatprep.subr.mxu0 0.0
  %1899 = vmatpush2.msra.mxu0 0.0
  %1900 = vmatprep.subr.mxu0 0.0
  %1901 = vmatpush2.msra.mxu0 0.0
  %1902 = vmatprep.subr.mxu0 0.0
  %1903 = vmatpush2.msra.mxu0 0.0
  %1904 = vmatprep.subr.mxu0 0.0
  %1905 = vmatpush2.msra.mxu0 0.0
  %1906 = vmatprep.subr.mxu0 0.0
  %1907 = vmatpush2.msra.mxu0 0.0
  %1908 = vmatprep.subr.mxu0 0.0
  %1909 = vmatpush2.msra.mxu0 0.0
  %1910 = vmatprep.subr.mxu0 0.0
  %1911 = vmatpush2.msra.mxu0 0.0
  %1912 = vmatprep.subr.mxu0 0.0
  %1913 = vmatpush2.msra.mxu0 0.0
  %1914 = vmatprep.mubr.f32.mxu0 0.0
  %1915 = vmatmul.mubr.f32.gmra.mxu0 %v1838
  %v1916 = vpop.f32.mrf.mxu0
  %v1917 = vadd.f32 0.0, %v1916
  %v1918 = vpop.f32.mrf.mxu0
  %v1919 = vadd.f32 0.0, %v1918
  %1920 = vdwg.mxu0
  %1921 = vmatprep.subr.mxu0 0.0
  %1922 = vmatpush1.msra.mxu0 0.0
  %1923 = vmatprep.subr.mxu0 0.0
  %1924 = vmatpush1.msra.mxu0 0.0
  %1925 = vmatprep.subr.mxu0 0.0
  %1926 = vmatpush1.msra.mxu0 0.0
  %1927 = vmatprep.subr.mxu0 0.0
  %1928 = vmatpush1.msra.mxu0 0.0
  %1929 = vmatprep.subr.mxu0 0.0
  %1930 = vmatpush1.msra.mxu0 0.0
  %1931 = vmatprep.subr.mxu0 0.0
  %1932 = vmatpush1.msra.mxu0 0.0
  %1933 = vmatprep.subr.mxu0 0.0
  %1934 = vmatpush1.msra.mxu0 0.0
  %1935 = vmatprep.subr.mxu0 0.0
  %1936 = vmatpush1.msra.mxu0 0.0
  %1937 = vmatprep.subr.mxu0 0.0
  %1938 = vmatpush1.msra.mxu0 0.0
  %1939 = vmatprep.subr.mxu0 0.0
  %1940 = vmatpush1.msra.mxu0 0.0
  %1941 = vmatprep.subr.mxu0 0.0
  %1942 = vmatpush1.msra.mxu0 0.0
  %1943 = vmatprep.subr.mxu0 0.0
  %1944 = vmatpush1.msra.mxu0 0.0
  %1945 = vmatprep.subr.mxu0 0.0
  %1946 = vmatpush1.msra.mxu0 0.0
  %1947 = vmatprep.subr.mxu0 0.0
  %1948 = vmatpush1.msra.mxu0 0.0
  %1949 = vmatprep.subr.mxu0 0.0
  %1950 = vmatpush1.msra.mxu0 0.0
  %1951 = vmatprep.subr.mxu0 %v1846
  %1952 = vmatpush1.msra.mxu0 %v1844
  %1953 = vmatprep.subr.mxu0 0.0
  %1954 = vmatpush2.msra.mxu0 0.0
  %1955 = vmatprep.subr.mxu0 0.0
  %1956 = vmatpush2.msra.mxu0 0.0
  %1957 = vmatprep.subr.mxu0 0.0
  %1958 = vmatpush2.msra.mxu0 0.0
  %1959 = vmatprep.subr.mxu0 0.0
  %1960 = vmatpush2.msra.mxu0 0.0
  %1961 = vmatprep.subr.mxu0 0.0
  %1962 = vmatpush2.msra.mxu0 0.0
  %1963 = vmatprep.subr.mxu0 0.0
  %1964 = vmatpush2.msra.mxu0 0.0
  %1965 = vmatprep.subr.mxu0 0.0
  %1966 = vmatpush2.msra.mxu0 0.0
  %1967 = vmatprep.subr.mxu0 0.0
  %1968 = vmatpush2.msra.mxu0 0.0
  %1969 = vmatprep.subr.mxu0 0.0
  %1970 = vmatpush2.msra.mxu0 0.0
  %1971 = vmatprep.subr.mxu0 0.0
  %1972 = vmatpush2.msra.mxu0 0.0
  %1973 = vmatprep.subr.mxu0 0.0
  %1974 = vmatpush2.msra.mxu0 0.0
  %1975 = vmatprep.subr.mxu0 0.0
  %1976 = vmatpush2.msra.mxu0 0.0
  %1977 = vmatprep.subr.mxu0 0.0
  %1978 = vmatpush2.msra.mxu0 0.0
  %1979 = vmatprep.subr.mxu0 0.0
  %1980 = vmatpush2.msra.mxu0 0.0
  %1981 = vmatprep.subr.mxu0 0.0
  %1982 = vmatpush2.msra.mxu0 0.0
  %1983 = vmatprep.subr.mxu0 0.0
  %1984 = vmatpush2.msra.mxu0 0.0
  %1985 = vmatprep.mubr.f32.mxu0 0.0
  %1986 = vmatmul.mubr.f32.gmra.mxu0 %v1838
  %v1987 = vpop.f32.mrf.mxu0
  %v1988 = vadd.f32 0.0, %v1987
  %v1989 = vpop.f32.mrf.mxu0
  %v1990 = vadd.f32 0.0, %v1989
  %1991 = vdwg.mxu0
  %1992 = vmatprep.subr.mxu0 0.0
  %1993 = vmatpush1.msra.mxu0 0.0
  %1994 = vmatprep.subr.mxu0 0.0
  %1995 = vmatpush1.msra.mxu0 0.0
  %1996 = vmatprep.subr.mxu0 0.0
  %1997 = vmatpush1.msra.mxu0 0.0
  %1998 = vmatprep.subr.mxu0 0.0
  %1999 = vmatpush1.msra.mxu0 0.0
  %2000 = vmatprep.subr.mxu0 0.0
  %2001 = vmatpush1.msra.mxu0 0.0
  %2002 = vmatprep.subr.mxu0 0.0
  %2003 = vmatpush1.msra.mxu0 0.0
  %2004 = vmatprep.subr.mxu0 0.0
  %2005 = vmatpush1.msra.mxu0 0.0
  %2006 = vmatprep.subr.mxu0 0.0
  %2007 = vmatpush1.msra.mxu0 0.0
  %2008 = vmatprep.subr.mxu0 0.0
  %2009 = vmatpush1.msra.mxu0 0.0
  %2010 = vmatprep.subr.mxu0 0.0
  %2011 = vmatpush1.msra.mxu0 0.0
  %2012 = vmatprep.subr.mxu0 0.0
  %2013 = vmatpush1.msra.mxu0 0.0
  %2014 = vmatprep.subr.mxu0 0.0
  %2015 = vmatpush1.msra.mxu0 0.0
  %2016 = vmatprep.subr.mxu0 0.0
  %2017 = vmatpush1.msra.mxu0 0.0
  %2018 = vmatprep.subr.mxu0 0.0
  %2019 = vmatpush1.msra.mxu0 0.0
  %2020 = vmatprep.subr.mxu0 0.0
  %2021 = vmatpush1.msra.mxu0 0.0
  %2022 = vmatprep.subr.mxu0 0.0
  %2023 = vmatpush1.msra.mxu0 %v1848
  %2024 = vmatprep.subr.mxu0 0.0
  %2025 = vmatpush2.msra.mxu0 0.0
  %2026 = vmatprep.subr.mxu0 0.0
  %2027 = vmatpush2.msra.mxu0 0.0
  %2028 = vmatprep.subr.mxu0 0.0
  %2029 = vmatpush2.msra.mxu0 0.0
  %2030 = vmatprep.subr.mxu0 0.0
  %2031 = vmatpush2.msra.mxu0 0.0
  %2032 = vmatprep.subr.mxu0 0.0
  %2033 = vmatpush2.msra.mxu0 0.0
  %2034 = vmatprep.subr.mxu0 0.0
  %2035 = vmatpush2.msra.mxu0 0.0
  %2036 = vmatprep.subr.mxu0 0.0
  %2037 = vmatpush2.msra.mxu0 0.0
  %2038 = vmatprep.subr.mxu0 0.0
  %2039 = vmatpush2.msra.mxu0 0.0
  %2040 = vmatprep.subr.mxu0 0.0
  %2041 = vmatpush2.msra.mxu0 0.0
  %2042 = vmatprep.subr.mxu0 0.0
  %2043 = vmatpush2.msra.mxu0 0.0
  %2044 = vmatprep.subr.mxu0 0.0
  %2045 = vmatpush2.msra.mxu0 0.0
  %2046 = vmatprep.subr.mxu0 0.0
  %2047 = vmatpush2.msra.mxu0 0.0
  %2048 = vmatprep.subr.mxu0 0.0
  %2049 = vmatpush2.msra.mxu0 0.0
  %2050 = vmatprep.subr.mxu0 0.0
  %2051 = vmatpush2.msra.mxu0 0.0
  %2052 = vmatprep.subr.mxu0 0.0
  %2053 = vmatpush2.msra.mxu0 0.0
  %2054 = vmatprep.subr.mxu0 0.0
  %2055 = vmatpush2.msra.mxu0 0.0
  %2056 = vmatprep.mubr.f32.mxu0 0.0
  %2057 = vmatmul.mubr.f32.gmra.mxu0 %v1838
  %v2058 = vpop.f32.mrf.mxu0
  %v2059 = vadd.f32 0.0, %v2058
  %v2060 = vpop.f32.mrf.mxu0
  %2061 = vdwg.mxu0
  %v2062 = vadd.f32 %v1803, %v1917
  %v2063 = vadd.f32 %v1804, %v1919
  %v2064 = vadd.f32 %v1805, %v1988
  %v2065 = vadd.f32 %v1806, %v1990
  %v2066 = vadd.f32 %v1807, %v2059
  %v2067 = vld [vmem:[#allocation2] sm:$0xff]
  %v2068 = vld [vmem:[#allocation2 + $0x8] sm:$0xff]
  %v2069 = vld [vmem:[#allocation2 + $0x10] sm:$0xff]
  %s2070 = scalar_lea.vmem %s1, 64
  %v2071 = vld [vmem:[%s2070] sm:$0xff]
  %v2075 = vcombine.high %v2067, %v2067
  %v2076 = vcombine.high %v2068, %v2068
  %v2077 = vcombine.high %v2069, %v2069
  %2078 = vrot.lane.b32.xlu0 %v2067, 90
  %v2079 = vpop.permute.xlu0 %2078
  %2080 = vrot.lane.b32.xlu0 %v2075, 90
  %v2081 = vpop.permute.xlu0 %2080
  %2082 = vrot.lane.b32.xlu0 %v2068, 90
  %v2083 = vpop.permute.xlu0 %2082
  %2084 = vrot.lane.b32.xlu0 %v2076, 90
  %v2085 = vpop.permute.xlu0 %2084
  %2086 = vrot.lane.b32.xlu0 %v2069, 90
  %v2087 = vpop.permute.xlu0 %2086
  %2088 = vrot.lane.b32.xlu0 %v2077, 90
  %v2089 = vpop.permute.xlu0 %2088
  %vm2090 = vcmask 736256
  %v2091 = vsel %vm2090, %v2079, %v2081
  %v2092 = vsel %vm2090, %v2081, %v2083
  %v2093 = vsel %vm2090, %v2083, %v2085
  %v2094 = vsel %vm2090, %v2085, %v2087
  %v2095 = vsel %vm2090, %v2087, %v2089
  %v2097 = vsel %vm56, %v2071, 0
  %v2099 = vsel %vm60, %v2091, 0
  %v2101 = vsel %vm60, %v2092, 0
  %v2103 = vsel %vm60, %v2093, 0
  %v2105 = vsel %vm60, %v2094, 0
  %v2107 = vsel %vm60, %v2095, 0
  %2109 = vmatprep.subr.mxu0 0.0
  %2110 = vmatpush1.msra.mxu0 0.0
  %2111 = vmatprep.subr.mxu0 0.0
  %2112 = vmatpush1.msra.mxu0 0.0
  %2113 = vmatprep.subr.mxu0 0.0
  %2114 = vmatpush1.msra.mxu0 0.0
  %2115 = vmatprep.subr.mxu0 0.0
  %2116 = vmatpush1.msra.mxu0 0.0
  %2117 = vmatprep.subr.mxu0 0.0
  %2118 = vmatpush1.msra.mxu0 0.0
  %2119 = vmatprep.subr.mxu0 0.0
  %2120 = vmatpush1.msra.mxu0 0.0
  %2121 = vmatprep.subr.mxu0 0.0
  %2122 = vmatpush1.msra.mxu0 0.0
  %2123 = vmatprep.subr.mxu0 0.0
  %2124 = vmatpush1.msra.mxu0 0.0
  %2125 = vmatprep.subr.mxu0 0.0
  %2126 = vmatpush1.msra.mxu0 0.0
  %2127 = vmatprep.subr.mxu0 0.0
  %2128 = vmatpush1.msra.mxu0 0.0
  %2129 = vmatprep.subr.mxu0 0.0
  %2130 = vmatpush1.msra.mxu0 0.0
  %2131 = vmatprep.subr.mxu0 0.0
  %2132 = vmatpush1.msra.mxu0 0.0
  %2133 = vmatprep.subr.mxu0 0.0
  %2134 = vmatpush1.msra.mxu0 0.0
  %2135 = vmatprep.subr.mxu0 0.0
  %2136 = vmatpush1.msra.mxu0 0.0
  %2137 = vmatprep.subr.mxu0 0.0
  %2138 = vmatpush1.msra.mxu0 0.0
  %2139 = vmatprep.subr.mxu0 %v2101
  %2140 = vmatpush1.msra.mxu0 %v2099
  %2141 = vmatprep.subr.mxu0 0.0
  %2142 = vmatpush2.msra.mxu0 0.0
  %2143 = vmatprep.subr.mxu0 0.0
  %2144 = vmatpush2.msra.mxu0 0.0
  %2145 = vmatprep.subr.mxu0 0.0
  %2146 = vmatpush2.msra.mxu0 0.0
  %2147 = vmatprep.subr.mxu0 0.0
  %2148 = vmatpush2.msra.mxu0 0.0
  %2149 = vmatprep.subr.mxu0 0.0
  %2150 = vmatpush2.msra.mxu0 0.0
  %2151 = vmatprep.subr.mxu0 0.0
  %2152 = vmatpush2.msra.mxu0 0.0
  %2153 = vmatprep.subr.mxu0 0.0
  %2154 = vmatpush2.msra.mxu0 0.0
  %2155 = vmatprep.subr.mxu0 0.0
  %2156 = vmatpush2.msra.mxu0 0.0
  %2157 = vmatprep.subr.mxu0 0.0
  %2158 = vmatpush2.msra.mxu0 0.0
  %2159 = vmatprep.subr.mxu0 0.0
  %2160 = vmatpush2.msra.mxu0 0.0
  %2161 = vmatprep.subr.mxu0 0.0
  %2162 = vmatpush2.msra.mxu0 0.0
  %2163 = vmatprep.subr.mxu0 0.0
  %2164 = vmatpush2.msra.mxu0 0.0
  %2165 = vmatprep.subr.mxu0 0.0
  %2166 = vmatpush2.msra.mxu0 0.0
  %2167 = vmatprep.subr.mxu0 0.0
  %2168 = vmatpush2.msra.mxu0 0.0
  %2169 = vmatprep.subr.mxu0 0.0
  %2170 = vmatpush2.msra.mxu0 0.0
  %2171 = vmatprep.subr.mxu0 0.0
  %2172 = vmatpush2.msra.mxu0 0.0
  %2173 = vmatprep.mubr.f32.mxu0 0.0
  %2174 = vmatmul.mubr.f32.gmra.mxu0 %v2097
  %v2175 = vpop.f32.mrf.mxu0
  %v2176 = vadd.f32 0.0, %v2175
  %v2177 = vpop.f32.mrf.mxu0
  %v2178 = vadd.f32 0.0, %v2177
  %2179 = vdwg.mxu0
  %2180 = vmatprep.subr.mxu0 0.0
  %2181 = vmatpush1.msra.mxu0 0.0
  %2182 = vmatprep.subr.mxu0 0.0
  %2183 = vmatpush1.msra.mxu0 0.0
  %2184 = vmatprep.subr.mxu0 0.0
  %2185 = vmatpush1.msra.mxu0 0.0
  %2186 = vmatprep.subr.mxu0 0.0
  %2187 = vmatpush1.msra.mxu0 0.0
  %2188 = vmatprep.subr.mxu0 0.0
  %2189 = vmatpush1.msra.mxu0 0.0
  %2190 = vmatprep.subr.mxu0 0.0
  %2191 = vmatpush1.msra.mxu0 0.0
  %2192 = vmatprep.subr.mxu0 0.0
  %2193 = vmatpush1.msra.mxu0 0.0
  %2194 = vmatprep.subr.mxu0 0.0
  %2195 = vmatpush1.msra.mxu0 0.0
  %2196 = vmatprep.subr.mxu0 0.0
  %2197 = vmatpush1.msra.mxu0 0.0
  %2198 = vmatprep.subr.mxu0 0.0
  %2199 = vmatpush1.msra.mxu0 0.0
  %2200 = vmatprep.subr.mxu0 0.0
  %2201 = vmatpush1.msra.mxu0 0.0
  %2202 = vmatprep.subr.mxu0 0.0
  %2203 = vmatpush1.msra.mxu0 0.0
  %2204 = vmatprep.subr.mxu0 0.0
  %2205 = vmatpush1.msra.mxu0 0.0
  %2206 = vmatprep.subr.mxu0 0.0
  %2207 = vmatpush1.msra.mxu0 0.0
  %2208 = vmatprep.subr.mxu0 0.0
  %2209 = vmatpush1.msra.mxu0 0.0
  %2210 = vmatprep.subr.mxu0 %v2105
  %2211 = vmatpush1.msra.mxu0 %v2103
  %2212 = vmatprep.subr.mxu0 0.0
  %2213 = vmatpush2.msra.mxu0 0.0
  %2214 = vmatprep.subr.mxu0 0.0
  %2215 = vmatpush2.msra.mxu0 0.0
  %2216 = vmatprep.subr.mxu0 0.0
  %2217 = vmatpush2.msra.mxu0 0.0
  %2218 = vmatprep.subr.mxu0 0.0
  %2219 = vmatpush2.msra.mxu0 0.0
  %2220 = vmatprep.subr.mxu0 0.0
  %2221 = vmatpush2.msra.mxu0 0.0
  %2222 = vmatprep.subr.mxu0 0.0
  %2223 = vmatpush2.msra.mxu0 0.0
  %2224 = vmatprep.subr.mxu0 0.0
  %2225 = vmatpush2.msra.mxu0 0.0
  %2226 = vmatprep.subr.mxu0 0.0
  %2227 = vmatpush2.msra.mxu0 0.0
  %2228 = vmatprep.subr.mxu0 0.0
  %2229 = vmatpush2.msra.mxu0 0.0
  %2230 = vmatprep.subr.mxu0 0.0
  %2231 = vmatpush2.msra.mxu0 0.0
  %2232 = vmatprep.subr.mxu0 0.0
  %2233 = vmatpush2.msra.mxu0 0.0
  %2234 = vmatprep.subr.mxu0 0.0
  %2235 = vmatpush2.msra.mxu0 0.0
  %2236 = vmatprep.subr.mxu0 0.0
  %2237 = vmatpush2.msra.mxu0 0.0
  %2238 = vmatprep.subr.mxu0 0.0
  %2239 = vmatpush2.msra.mxu0 0.0
  %2240 = vmatprep.subr.mxu0 0.0
  %2241 = vmatpush2.msra.mxu0 0.0
  %2242 = vmatprep.subr.mxu0 0.0
  %2243 = vmatpush2.msra.mxu0 0.0
  %2244 = vmatprep.mubr.f32.mxu0 0.0
  %2245 = vmatmul.mubr.f32.gmra.mxu0 %v2097
  %v2246 = vpop.f32.mrf.mxu0
  %v2247 = vadd.f32 0.0, %v2246
  %v2248 = vpop.f32.mrf.mxu0
  %v2249 = vadd.f32 0.0, %v2248
  %2250 = vdwg.mxu0
  %2251 = vmatprep.subr.mxu0 0.0
  %2252 = vmatpush1.msra.mxu0 0.0
  %2253 = vmatprep.subr.mxu0 0.0
  %2254 = vmatpush1.msra.mxu0 0.0
  %2255 = vmatprep.subr.mxu0 0.0
  %2256 = vmatpush1.msra.mxu0 0.0
  %2257 = vmatprep.subr.mxu0 0.0
  %2258 = vmatpush1.msra.mxu0 0.0
  %2259 = vmatprep.subr.mxu0 0.0
  %2260 = vmatpush1.msra.mxu0 0.0
  %2261 = vmatprep.subr.mxu0 0.0
  %2262 = vmatpush1.msra.mxu0 0.0
  %2263 = vmatprep.subr.mxu0 0.0
  %2264 = vmatpush1.msra.mxu0 0.0
  %2265 = vmatprep.subr.mxu0 0.0
  %2266 = vmatpush1.msra.mxu0 0.0
  %2267 = vmatprep.subr.mxu0 0.0
  %2268 = vmatpush1.msra.mxu0 0.0
  %2269 = vmatprep.subr.mxu0 0.0
  %2270 = vmatpush1.msra.mxu0 0.0
  %2271 = vmatprep.subr.mxu0 0.0
  %2272 = vmatpush1.msra.mxu0 0.0
  %2273 = vmatprep.subr.mxu0 0.0
  %2274 = vmatpush1.msra.mxu0 0.0
  %2275 = vmatprep.subr.mxu0 0.0
  %2276 = vmatpush1.msra.mxu0 0.0
  %2277 = vmatprep.subr.mxu0 0.0
  %2278 = vmatpush1.msra.mxu0 0.0
  %2279 = vmatprep.subr.mxu0 0.0
  %2280 = vmatpush1.msra.mxu0 0.0
  %2281 = vmatprep.subr.mxu0 0.0
  %2282 = vmatpush1.msra.mxu0 %v2107
  %2283 = vmatprep.subr.mxu0 0.0
  %2284 = vmatpush2.msra.mxu0 0.0
  %2285 = vmatprep.subr.mxu0 0.0
  %2286 = vmatpush2.msra.mxu0 0.0
  %2287 = vmatprep.subr.mxu0 0.0
  %2288 = vmatpush2.msra.mxu0 0.0
  %2289 = vmatprep.subr.mxu0 0.0
  %2290 = vmatpush2.msra.mxu0 0.0
  %2291 = vmatprep.subr.mxu0 0.0
  %2292 = vmatpush2.msra.mxu0 0.0
  %2293 = vmatprep.subr.mxu0 0.0
  %2294 = vmatpush2.msra.mxu0 0.0
  %2295 = vmatprep.subr.mxu0 0.0
  %2296 = vmatpush2.msra.mxu0 0.0
  %2297 = vmatprep.subr.mxu0 0.0
  %2298 = vmatpush2.msra.mxu0 0.0
  %2299 = vmatprep.subr.mxu0 0.0
  %2300 = vmatpush2.msra.mxu0 0.0
  %2301 = vmatprep.subr.mxu0 0.0
  %2302 = vmatpush2.msra.mxu0 0.0
  %2303 = vmatprep.subr.mxu0 0.0
  %2304 = vmatpush2.msra.mxu0 0.0
  %2305 = vmatprep.subr.mxu0 0.0
  %2306 = vmatpush2.msra.mxu0 0.0
  %2307 = vmatprep.subr.mxu0 0.0
  %2308 = vmatpush2.msra.mxu0 0.0
  %2309 = vmatprep.subr.mxu0 0.0
  %2310 = vmatpush2.msra.mxu0 0.0
  %2311 = vmatprep.subr.mxu0 0.0
  %2312 = vmatpush2.msra.mxu0 0.0
  %2313 = vmatprep.subr.mxu0 0.0
  %2314 = vmatpush2.msra.mxu0 0.0
  %2315 = vmatprep.mubr.f32.mxu0 0.0
  %2316 = vmatmul.mubr.f32.gmra.mxu0 %v2097
  %v2317 = vpop.f32.mrf.mxu0
  %v2318 = vadd.f32 0.0, %v2317
  %v2319 = vpop.f32.mrf.mxu0
  %2320 = vdwg.mxu0
  %v2321 = vadd.f32 %v2062, %v2176
  %v2322 = vadd.f32 %v2063, %v2178
  %v2323 = vadd.f32 %v2064, %v2247
  %v2324 = vadd.f32 %v2065, %v2249
  %v2325 = vadd.f32 %v2066, %v2318
  %v2326 = vld [vmem:[%s2] sm:$0x1f]
  %v2328 = vlaneseq
  %v2329 = vshrl.u32 %v2328, 7
  %v2330 = vsub.s32 0, %v2329
  %v2331 = vrot.slane %v2326, %v2330
  %v2332 = vlaneseq
  %v2333 = vshrl.u32 %v2332, 7
  %v2334 = vsub.s32 1, %v2333
  %v2335 = vrot.slane %v2326, %v2334
  %v2336 = vlaneseq
  %v2337 = vshrl.u32 %v2336, 7
  %v2338 = vsub.s32 2, %v2337
  %v2339 = vrot.slane %v2326, %v2338
  %v2340 = vlaneseq
  %v2341 = vshrl.u32 %v2340, 7
  %v2342 = vsub.s32 3, %v2341
  %v2343 = vrot.slane %v2326, %v2342
  %v2344 = vlaneseq
  %v2345 = vshrl.u32 %v2344, 7
  %v2346 = vsub.s32 4, %v2345
  %v2347 = vrot.slane %v2326, %v2346
  %v2353 = vmul.f32 %v2321, %v2331
  %v2354 = vmul.f32 %v2322, %v2335
  %v2355 = vmul.f32 %v2323, %v2339
  %v2356 = vmul.f32 %v2324, %v2343
  %v2357 = vmul.f32 %v2325, %v2347
  %v2358 = vadd.f32 %v2353, %v2354
  %v2359 = vadd.f32 %v2358, %v2355
  %v2360 = vadd.f32 %v2359, %v2356
  %v2361 = vadd.f32 %v2360, %v2357
  %2362 = vadd.xlane.f32.xlu0 %v2361
  %v2363 = vpop.xlane.xlu0 %2362
  %v2364 = vmul.f32 %v2363, 0.001953125
  %v2365 = vsub.f32 %v2321, %v2364
  %v2366 = vsub.f32 %v2322, %v2364
  %v2367 = vsub.f32 %v2323, %v2364
  %v2368 = vsub.f32 %v2324, %v2364
  %v2369 = vsub.f32 %v2325, %v2364
  %v2370 = vmul.f32 %v2365, %v2331
  %v2371 = vmul.f32 %v2366, %v2335
  %v2372 = vmul.f32 %v2367, %v2339
  %v2373 = vmul.f32 %v2368, %v2343
  %v2374 = vmul.f32 %v2369, %v2347
  %v2375 = vmul.f32 %v2370, %v2370
  %v2376 = vmul.f32 %v2371, %v2371
  %v2377 = vmul.f32 %v2372, %v2372
  %v2378 = vmul.f32 %v2373, %v2373
  %v2379 = vmul.f32 %v2374, %v2374
  %v2380 = vadd.f32 %v2375, %v2376
  %v2381 = vadd.f32 %v2380, %v2377
  %v2382 = vadd.f32 %v2381, %v2378
  %v2383 = vadd.f32 %v2382, %v2379
  %2384 = vadd.xlane.f32.xlu0 %v2383
  %v2385 = vpop.xlane.xlu0 %2384
  %v2386 = vmul.f32 %v2385, 0.001953125
  %s2387 = scalar_lea.vmem %s1, 72
  %v2388 = vld [vmem:[%s2387] sm:$0xff]
  %v2389 = vadd.f32 %v2386, 1e-05
  %v2390 = vrsqrt.pop %v2389
  %v2391 = vmul.f32 %v2388, %v2390
  %v2392 = vmul.f32 %v2364, %v2391
  %2394 = vrot.lane.b32.xlu0 %v2392, 1
  %v2395 = vpop.permute.xlu0 %2394
  %v2397 = vsub.f32 %v2388, %v2395
  %2399 = vset.pattern.permute.xlu0 0
  %2400 = vperm.xlu0 %2399, %v2391
  %v2401 = vpop.permute.xlu0 %2400
  %v2403 = vmul.f32 %v2321, %v2401
  %v2404 = vmul.f32 %v2322, %v2401
  %v2405 = vmul.f32 %v2323, %v2401
  %v2406 = vmul.f32 %v2324, %v2401
  %v2407 = vmul.f32 %v2325, %v2401
  %2409 = vset.pattern.permute.xlu0 1
  %2410 = vperm.xlu0 %2409, %v2397
  %v2411 = vpop.permute.xlu0 %2410
  %v2413 = vadd.f32 %v2403, %v2411
  %v2414 = vadd.f32 %v2404, %v2411
  %v2415 = vadd.f32 %v2405, %v2411
  %v2416 = vadd.f32 %v2406, %v2411
  %v2417 = vadd.f32 %v2407, %v2411
  %2418 = vst [vmem:[%s3] sm:$0xff] %v2413
  %2419 = vst [vmem:[%s3 + $0x8] sm:$0xff] %v2414
  %2420 = vst [vmem:[%s3 + $0x10] sm:$0xff] %v2415
  %2421 = vst [vmem:[%s3 + $0x18] sm:$0xff] %v2416
  %2422 = vst [vmem:[%s3 + $0x20] sm:$0xff] %v2417
  // Predicated region
  $region14: #{relu_conv_bn.1} parent=0 // pred_check
    _
  $region15: #{relu_conv_bn.1} parent=0 // pred_check_branch
    %2424 = sbr.rel (0) target = $region17
  $region16: #{relu_conv_bn.1} parent=0 // pred_region
    _
  $region17: #{relu_conv_bn.1} parent=0 // pred_fallthru
    _
  // Predicated region
  $region18: #{relu_conv_bn.1} parent=0 // pred_check
    _
  $region19: #{relu_conv_bn.1} parent=0 // pred_check_branch
    %2426 = sbr.rel (0) target = $region21
  $region20: #{relu_conv_bn.1} parent=0 // pred_region
    _
  $region21: #{relu_conv_bn.1} parent=0 // pred_fallthru
    _

</llo_original>
